<compile_context>
chip_gen: v7x
topology: tpu7x:2x2x1
jax: 0.10.0
libtpu: 0.0.40
codegen_flags: <defaults>
</compile_context>

<pallas_src>
import functools
import math

import jax
import jax.numpy as jnp
from jax.experimental import pallas as pl
from jax.experimental.pallas import tpu as pltpu


def _cross_attn_kernel(tgt_ref, qpos_ref, mem_ref, pos_ref,        # (N*L, E) activations
                       wqkv_ref, bqkv_ref, woT_ref, bo_ref, ln_ref,  # pre-packed params
                       out_ref,                                     # (N*Lq, E)
                       *, nhead, n_batch, lq, lk, d_model, scale, eps):
    E = d_model
    Dh = E // nhead
    NLq = n_batch * lq
    NLk = n_batch * lk

    tgt = tgt_ref[...]                        # (N*Lq, E) residual input
    q_in = tgt + qpos_ref[...]                # query = tgt + query_pos
    mem = mem_ref[...]                        # (N*Lk, E) value input
    k_in = mem + pos_ref[...]                 # key = memory + pos

    # One wide MXU push for Q/K/V over all batches.
    # Rows: [q_in ; k_in ; mem]  (all row counts are multiples of 8 -> free concat)
    # Lanes: [WqT | WkT | WvT]
    x_all = jnp.concatenate([q_in, k_in, mem], axis=0)            # (N*(Lq+2Lk), E)
    proj = jnp.dot(x_all, wqkv_ref[...], preferred_element_type=jnp.float32)
    proj = proj + bqkv_ref[...]               # broadcast [bq|bk|bv]; off-diagonal
                                              # blocks get the wrong bias but are
                                              # never read.

    Q = proj[0:NLq, 0 * E:1 * E] * scale                          # (N*Lq, E)
    K = proj[NLq:NLq + NLk, 1 * E:2 * E]                          # (N*Lk, E)
    V = proj[NLq + NLk:NLq + 2 * NLk, 2 * E:3 * E]                # (N*Lk, E)

    woT = woT_ref[...]                        # (E, E) pre-transposed out-proj
    gamma = ln_ref[0:1, :]                    # (1, E)
    beta = ln_ref[1:2, :]

    attn_blocks = []
    for b in range(n_batch):                  # tiny, unrolled; row slices 8-aligned
        Qb = Q[b * lq:(b + 1) * lq, :]
        Kb = K[b * lk:(b + 1) * lk, :]
        Vb = V[b * lk:(b + 1) * lk, :]
        acc = jnp.zeros((lq, E), jnp.float32)
        for h in range(nhead):
            hs = slice(h * Dh, (h + 1) * Dh)
            # per-head scaled dot-product attention
            S = jax.lax.dot_general(Qb[:, hs], Kb[:, hs],
                                    (((1,), (1,)), ((), ())),
                                    preferred_element_type=jnp.float32)  # (Lq, Lk)
            S = S - jnp.max(S, axis=-1, keepdims=True)
            P = jnp.exp(S)
            l = jnp.sum(P, axis=-1, keepdims=True)
            Oh = jnp.dot(P, Vb[:, hs], preferred_element_type=jnp.float32)  # (Lq, Dh)
            r = pl.reciprocal(l, approx=True)      # EUP slot (nearly free)
            r = r * (2.0 - l * r)                  # one Newton step -> ~f32-exact
            # accumulate out-projection per head (sublane slice of WoT is free)
            acc = acc + jnp.dot(Oh * r, woT[hs, :],
                                preferred_element_type=jnp.float32)
        attn_blocks.append(acc)
    attn = jnp.concatenate(attn_blocks, axis=0)    # (N*Lq, E), row-aligned concat

    # residual + out-proj bias + LayerNorm, single full-width store
    x = tgt + attn + bo_ref[...]
    mean = jnp.mean(x, axis=-1, keepdims=True)
    xc = x - mean
    var = jnp.mean(xc * xc, axis=-1, keepdims=True)
    y = xc * jax.lax.rsqrt(var + eps) * gamma + beta
    out_ref[...] = y.astype(out_ref.dtype)


def pack_params(params):
    """One-time parameter packing (call at init, NOT per forward)."""
    E = params["wq"].shape[0]
    w_qkv = jnp.concatenate(
        [params["wq"].T, params["wk"].T, params["wv"].T], axis=1)       # (E, 3E)
    b_qkv = jnp.concatenate(
        [params["bq"], params["bk"], params["bv"]]).reshape(1, 3 * E)   # (1, 3E)
    return {
        "w_qkv": w_qkv,
        "b_qkv": b_qkv,
        "woT": params["wo"].T,                                          # (E, E)
        "bo": params["bo"].reshape(1, E),                               # (1, E)
        "ln": jnp.stack([params["ln_gamma"], params["ln_beta"]]),       # (2, E)
    }


def cross_attention_layer(tgt, memory, query_pos, pos, packed, *, nhead):
    """tgt/query_pos: (Lq, N, E); memory/pos: (Lk, N, E). Returns (Lq, N, E)."""
    Lq, N, E = tgt.shape
    Lk = memory.shape[0]
    scale = 1.0 / math.sqrt(E // nhead)

    # batch-major rows: (L, N, E) -> (N*L, E); per-batch blocks become 8-aligned
    # row ranges inside the kernel (one tiny transpose, no lane slicing later).
    to_rows = lambda x: jnp.transpose(x, (1, 0, 2)).reshape(x.shape[1] * x.shape[0], E)
    tgt2, qpos2 = to_rows(tgt), to_rows(query_pos)
    mem2, pos2 = to_rows(memory), to_rows(pos)

    vmem = pl.BlockSpec(memory_space=pltpu.MemorySpace.VMEM)
    out2 = pl.pallas_call(
        functools.partial(_cross_attn_kernel, nhead=nhead, n_batch=N,
                          lq=Lq, lk=Lk, d_model=E, scale=scale, eps=1e-5),
        out_shape=jax.ShapeDtypeStruct((N * Lq, E), jnp.float32),
        in_specs=[vmem] * 9,
        out_specs=vmem,
    )(tgt2, qpos2, mem2, pos2,
      packed["w_qkv"], packed["b_qkv"], packed["woT"], packed["bo"], packed["ln"])

    return out2.reshape(N, Lq, E).transpose(1, 0, 2)


def reference(tgt, memory, query_pos, pos, params, nhead):
    """Pure-JAX reference matching torch F.multi_head_attention_forward + LN."""
    Lq, N, E = tgt.shape
    Lk = memory.shape[0]
    Dh = E // nhead
    q = tgt + query_pos
    k = memory + pos
    v = memory
    proj = lambda x, w, b: jnp.einsum("lne,fe->lnf", x, w) + b
    Q = proj(q, params["wq"], params["bq"]).reshape(Lq, N, nhead, Dh) / math.sqrt(Dh)
    K = proj(k, params["wk"], params["bk"]).reshape(Lk, N, nhead, Dh)
    V = proj(v, params["wv"], params["bv"]).reshape(Lk, N, nhead, Dh)
    S = jnp.einsum("qnhd,knhd->nhqk", Q, K)
    P = jax.nn.softmax(S, axis=-1)
    O = jnp.einsum("nhqk,knhd->qnhd", P, V).reshape(Lq, N, E)
    attn = jnp.einsum("qne,fe->qnf", O, params["wo"]) + params["bo"]
    x = tgt + attn
    mean = x.mean(-1, keepdims=True)
    var = ((x - mean) ** 2).mean(-1, keepdims=True)
    return (x - mean) / jnp.sqrt(var + 1e-5) * params["ln_gamma"] + params["ln_beta"]


def init_params(key, d_model):
    def xavier(k, shape):
        bound = math.sqrt(6.0 / (shape[0] + shape[1]))
        return jax.random.uniform(k, shape, jnp.float32, -bound, bound)
    ks = jax.random.split(key, 12)
    return {
        "wq": xavier(ks[0], (d_model, d_model)),
        "wk": xavier(ks[1], (d_model, d_model)),
        "wv": xavier(ks[2], (d_model, d_model)),
        "bq": 0.1 * jax.random.normal(ks[3], (d_model,), jnp.float32),
        "bk": 0.1 * jax.random.normal(ks[4], (d_model,), jnp.float32),
        "bv": 0.1 * jax.random.normal(ks[5], (d_model,), jnp.float32),
        "wo": xavier(ks[6], (d_model, d_model)),
        "bo": 0.1 * jax.random.normal(ks[7], (d_model,), jnp.float32),
        "ln_gamma": 1.0 + 0.1 * jax.random.normal(ks[8], (d_model,), jnp.float32),
        "ln_beta": 0.1 * jax.random.normal(ks[9], (d_model,), jnp.float32),
    }


if __name__ == "__main__":
    d_model, nhead = 32, 4
    Lq, Lk, N = 8, 16, 2              # num queries, memory length, batch

    key = jax.random.PRNGKey(0)
    kp, kt, km, kqp, kpp = jax.random.split(key, 5)
    params = init_params(kp, d_model)
    packed = jax.tree_util.tree_map(jax.block_until_ready, pack_params(params))  # one-time

    tgt = jax.random.normal(kt, (Lq, N, d_model), jnp.float32)
    memory = jax.random.normal(km, (Lk, N, d_model), jnp.float32)
    query_pos = jax.random.normal(kqp, (Lq, N, d_model), jnp.float32)
    pos = jax.random.normal(kpp, (Lk, N, d_model), jnp.float32)

    layer = jax.jit(functools.partial(cross_attention_layer, nhead=nhead))
    out = layer(tgt, memory, query_pos, pos, packed)
    out = jax.block_until_ready(out)

    ref = reference(tgt, memory, query_pos, pos, params, nhead)
    assert out.shape == (Lq, N, d_model)
    assert jnp.allclose(out, ref, atol=1e-4, rtol=1e-4), "mismatch vs JAX reference"
    print("KERNEL_OK")
</pallas_src>

<mosaic_0001>
module attributes {stable_mosaic.version = 11 : i64} {
  func.func @_cross_attn_kernel(%arg0: memref<16x32xf32, #tpu.memory_space<vmem>>, %arg1: memref<16x32xf32, #tpu.memory_space<vmem>>, %arg2: memref<32x32xf32, #tpu.memory_space<vmem>>, %arg3: memref<32x32xf32, #tpu.memory_space<vmem>>, %arg4: memref<32x96xf32, #tpu.memory_space<vmem>>, %arg5: memref<1x96xf32, #tpu.memory_space<vmem>>, %arg6: memref<32x32xf32, #tpu.memory_space<vmem>>, %arg7: memref<1x32xf32, #tpu.memory_space<vmem>>, %arg8: memref<2x32xf32, #tpu.memory_space<vmem>>, %arg9: memref<16x32xf32, #tpu.memory_space<vmem>>) attributes {dimension_semantics = [], scalar_prefetch = 0 : i64, scratch_operands = 0 : i64, tpu.core_type = #tpu.core_type<tc>} {
    %c0 = arith.constant 0 : index
    %c0_0 = arith.constant 0 : index
    %0 = vector.load %arg0[%c0, %c0_0] : memref<16x32xf32, #tpu.memory_space<vmem>>, vector<16x32xf32>
    %c0_1 = arith.constant 0 : index
    %c0_2 = arith.constant 0 : index
    %1 = vector.load %arg1[%c0_1, %c0_2] : memref<16x32xf32, #tpu.memory_space<vmem>>, vector<16x32xf32>
    %2 = arith.addf %0, %1 : vector<16x32xf32>
    %c0_3 = arith.constant 0 : index
    %c0_4 = arith.constant 0 : index
    %3 = vector.load %arg2[%c0_3, %c0_4] : memref<32x32xf32, #tpu.memory_space<vmem>>, vector<32x32xf32>
    %c0_5 = arith.constant 0 : index
    %c0_6 = arith.constant 0 : index
    %4 = vector.load %arg3[%c0_5, %c0_6] : memref<32x32xf32, #tpu.memory_space<vmem>>, vector<32x32xf32>
    %5 = arith.addf %3, %4 : vector<32x32xf32>
    %6 = tpu.concatenate %2, %5, %3 in 0 : vector<16x32xf32>, vector<32x32xf32>, vector<32x32xf32> -> vector<80x32xf32>
    %c0_7 = arith.constant 0 : index
    %c0_8 = arith.constant 0 : index
    %7 = vector.load %arg4[%c0_7, %c0_8] : memref<32x96xf32, #tpu.memory_space<vmem>>, vector<32x96xf32>
    %cst = arith.constant dense<0.000000e+00> : vector<80x96xf32>
    %8 = tpu.matmul %6, %7, %cst {dimension_numbers = #tpu.dot_dimension_numbers<[1], [0], [0], [1], [0, 0, 1, 1], [], []>} : vector<80x32xf32>, vector<32x96xf32>, vector<80x96xf32> -> vector<80x96xf32>
    %c0_9 = arith.constant 0 : index
    %c0_10 = arith.constant 0 : index
    %9 = vector.load %arg5[%c0_9, %c0_10] : memref<1x96xf32, #tpu.memory_space<vmem>>, vector<1x96xf32>
    %10 = vector.broadcast %9 : vector<1x96xf32> to vector<80x96xf32>
    %11 = arith.addf %8, %10 : vector<80x96xf32>
    %12 = vector.extract_strided_slice %11 {offsets = [0, 0], sizes = [16, 32], strides = [1, 1]} : vector<80x96xf32> to vector<16x32xf32>
    %cst_11 = arith.constant 0.353553385 : f32
    %13 = vector.broadcast %cst_11 : f32 to vector<16x32xf32>
    %14 = arith.mulf %12, %13 : vector<16x32xf32>
    %15 = vector.extract_strided_slice %11 {offsets = [16, 32], sizes = [32, 32], strides = [1, 1]} : vector<80x96xf32> to vector<32x32xf32>
    %16 = vector.extract_strided_slice %11 {offsets = [48, 64], sizes = [32, 32], strides = [1, 1]} : vector<80x96xf32> to vector<32x32xf32>
    %c0_12 = arith.constant 0 : index
    %c0_13 = arith.constant 0 : index
    %17 = vector.load %arg6[%c0_12, %c0_13] : memref<32x32xf32, #tpu.memory_space<vmem>>, vector<32x32xf32>
    %c0_14 = arith.constant 0 : index
    %c0_15 = arith.constant 0 : index
    %18 = vector.load %arg8[%c0_14, %c0_15] : memref<2x32xf32, #tpu.memory_space<vmem>>, vector<1x32xf32>
    %c1 = arith.constant 1 : index
    %c0_16 = arith.constant 0 : index
    %19 = vector.load %arg8[%c1, %c0_16] : memref<2x32xf32, #tpu.memory_space<vmem>>, vector<1x32xf32>
    %20 = vector.extract_strided_slice %14 {offsets = [0, 0], sizes = [8, 32], strides = [1, 1]} : vector<16x32xf32> to vector<8x32xf32>
    %21 = vector.extract_strided_slice %15 {offsets = [0, 0], sizes = [16, 32], strides = [1, 1]} : vector<32x32xf32> to vector<16x32xf32>
    %22 = vector.extract_strided_slice %16 {offsets = [0, 0], sizes = [16, 32], strides = [1, 1]} : vector<32x32xf32> to vector<16x32xf32>
    %cst_17 = arith.constant 0.000000e+00 : f32
    %23 = vector.broadcast %cst_17 : f32 to vector<8x32xf32>
    %24 = vector.extract_strided_slice %20 {offsets = [0, 0], sizes = [8, 8], strides = [1, 1]} : vector<8x32xf32> to vector<8x8xf32>
    %25 = vector.extract_strided_slice %21 {offsets = [0, 0], sizes = [16, 8], strides = [1, 1]} : vector<16x32xf32> to vector<16x8xf32>
    %cst_18 = arith.constant dense<0.000000e+00> : vector<8x16xf32>
    %26 = tpu.matmul %24, %25, %cst_18 {dimension_numbers = #tpu.dot_dimension_numbers<[1], [1], [0], [0], [0, 0, 1, 0], [], []>} : vector<8x8xf32>, vector<16x8xf32>, vector<8x16xf32> -> vector<8x16xf32>
    %cst_19 = arith.constant dense<0xFF800000> : vector<8xf32>
    %27 = vector.multi_reduction <maximumf>, %26, %cst_19 [1] : vector<8x16xf32> to vector<8xf32>
    %28 = vector.shape_cast %27 : vector<8xf32> to vector<8x1xf32>
    %29 = vector.broadcast %28 : vector<8x1xf32> to vector<8x16xf32>
    %30 = arith.subf %26, %29 : vector<8x16xf32>
    %31 = math.exp %30 : vector<8x16xf32>
    %cst_20 = arith.constant dense<0.000000e+00> : vector<8xf32>
    %32 = vector.multi_reduction <add>, %31, %cst_20 [1] : vector<8x16xf32> to vector<8xf32>
    %33 = vector.shape_cast %32 : vector<8xf32> to vector<8x1xf32>
    %34 = vector.extract_strided_slice %22 {offsets = [0, 0], sizes = [16, 8], strides = [1, 1]} : vector<16x32xf32> to vector<16x8xf32>
    %cst_21 = arith.constant dense<0.000000e+00> : vector<8x8xf32>
    %35 = tpu.matmul %31, %34, %cst_21 {dimension_numbers = #tpu.dot_dimension_numbers<[1], [0], [0], [1], [0, 0, 1, 1], [], []>} : vector<8x16xf32>, vector<16x8xf32>, vector<8x8xf32> -> vector<8x8xf32>
    %36 = tpu.reciprocal %33 {approx = true} : vector<8x1xf32> -> vector<8x1xf32>
    %37 = arith.mulf %33, %36 : vector<8x1xf32>
    %cst_22 = arith.constant 2.000000e+00 : f32
    %38 = vector.broadcast %cst_22 : f32 to vector<8x1xf32>
    %39 = arith.subf %38, %37 : vector<8x1xf32>
    %40 = arith.mulf %36, %39 : vector<8x1xf32>
    %41 = vector.broadcast %40 : vector<8x1xf32> to vector<8x8xf32>
    %42 = arith.mulf %35, %41 : vector<8x8xf32>
    %43 = vector.extract_strided_slice %17 {offsets = [0, 0], sizes = [8, 32], strides = [1, 1]} : vector<32x32xf32> to vector<8x32xf32>
    %cst_23 = arith.constant dense<0.000000e+00> : vector<8x32xf32>
    %44 = tpu.matmul %42, %43, %cst_23 {dimension_numbers = #tpu.dot_dimension_numbers<[1], [0], [0], [1], [0, 0, 1, 1], [], []>} : vector<8x8xf32>, vector<8x32xf32>, vector<8x32xf32> -> vector<8x32xf32>
    %45 = arith.addf %23, %44 : vector<8x32xf32>
    %46 = vector.extract_strided_slice %20 {offsets = [0, 8], sizes = [8, 8], strides = [1, 1]} : vector<8x32xf32> to vector<8x8xf32>
    %47 = vector.extract_strided_slice %21 {offsets = [0, 8], sizes = [16, 8], strides = [1, 1]} : vector<16x32xf32> to vector<16x8xf32>
    %cst_24 = arith.constant dense<0.000000e+00> : vector<8x16xf32>
    %48 = tpu.matmul %46, %47, %cst_24 {dimension_numbers = #tpu.dot_dimension_numbers<[1], [1], [0], [0], [0, 0, 1, 0], [], []>} : vector<8x8xf32>, vector<16x8xf32>, vector<8x16xf32> -> vector<8x16xf32>
    %cst_25 = arith.constant dense<0xFF800000> : vector<8xf32>
    %49 = vector.multi_reduction <maximumf>, %48, %cst_25 [1] : vector<8x16xf32> to vector<8xf32>
    %50 = vector.shape_cast %49 : vector<8xf32> to vector<8x1xf32>
    %51 = vector.broadcast %50 : vector<8x1xf32> to vector<8x16xf32>
    %52 = arith.subf %48, %51 : vector<8x16xf32>
    %53 = math.exp %52 : vector<8x16xf32>
    %cst_26 = arith.constant dense<0.000000e+00> : vector<8xf32>
    %54 = vector.multi_reduction <add>, %53, %cst_26 [1] : vector<8x16xf32> to vector<8xf32>
    %55 = vector.shape_cast %54 : vector<8xf32> to vector<8x1xf32>
    %56 = vector.extract_strided_slice %22 {offsets = [0, 8], sizes = [16, 8], strides = [1, 1]} : vector<16x32xf32> to vector<16x8xf32>
    %cst_27 = arith.constant dense<0.000000e+00> : vector<8x8xf32>
    %57 = tpu.matmul %53, %56, %cst_27 {dimension_numbers = #tpu.dot_dimension_numbers<[1], [0], [0], [1], [0, 0, 1, 1], [], []>} : vector<8x16xf32>, vector<16x8xf32>, vector<8x8xf32> -> vector<8x8xf32>
    %58 = tpu.reciprocal %55 {approx = true} : vector<8x1xf32> -> vector<8x1xf32>
    %59 = arith.mulf %55, %58 : vector<8x1xf32>
    %cst_28 = arith.constant 2.000000e+00 : f32
    %60 = vector.broadcast %cst_28 : f32 to vector<8x1xf32>
    %61 = arith.subf %60, %59 : vector<8x1xf32>
    %62 = arith.mulf %58, %61 : vector<8x1xf32>
    %63 = vector.broadcast %62 : vector<8x1xf32> to vector<8x8xf32>
    %64 = arith.mulf %57, %63 : vector<8x8xf32>
    %65 = vector.extract_strided_slice %17 {offsets = [8, 0], sizes = [8, 32], strides = [1, 1]} : vector<32x32xf32> to vector<8x32xf32>
    %cst_29 = arith.constant dense<0.000000e+00> : vector<8x32xf32>
    %66 = tpu.matmul %64, %65, %cst_29 {dimension_numbers = #tpu.dot_dimension_numbers<[1], [0], [0], [1], [0, 0, 1, 1], [], []>} : vector<8x8xf32>, vector<8x32xf32>, vector<8x32xf32> -> vector<8x32xf32>
    %67 = arith.addf %45, %66 : vector<8x32xf32>
    %68 = vector.extract_strided_slice %20 {offsets = [0, 16], sizes = [8, 8], strides = [1, 1]} : vector<8x32xf32> to vector<8x8xf32>
    %69 = vector.extract_strided_slice %21 {offsets = [0, 16], sizes = [16, 8], strides = [1, 1]} : vector<16x32xf32> to vector<16x8xf32>
    %cst_30 = arith.constant dense<0.000000e+00> : vector<8x16xf32>
    %70 = tpu.matmul %68, %69, %cst_30 {dimension_numbers = #tpu.dot_dimension_numbers<[1], [1], [0], [0], [0, 0, 1, 0], [], []>} : vector<8x8xf32>, vector<16x8xf32>, vector<8x16xf32> -> vector<8x16xf32>
    %cst_31 = arith.constant dense<0xFF800000> : vector<8xf32>
    %71 = vector.multi_reduction <maximumf>, %70, %cst_31 [1] : vector<8x16xf32> to vector<8xf32>
    %72 = vector.shape_cast %71 : vector<8xf32> to vector<8x1xf32>
    %73 = vector.broadcast %72 : vector<8x1xf32> to vector<8x16xf32>
    %74 = arith.subf %70, %73 : vector<8x16xf32>
    %75 = math.exp %74 : vector<8x16xf32>
    %cst_32 = arith.constant dense<0.000000e+00> : vector<8xf32>
    %76 = vector.multi_reduction <add>, %75, %cst_32 [1] : vector<8x16xf32> to vector<8xf32>
    %77 = vector.shape_cast %76 : vector<8xf32> to vector<8x1xf32>
    %78 = vector.extract_strided_slice %22 {offsets = [0, 16], sizes = [16, 8], strides = [1, 1]} : vector<16x32xf32> to vector<16x8xf32>
    %cst_33 = arith.constant dense<0.000000e+00> : vector<8x8xf32>
    %79 = tpu.matmul %75, %78, %cst_33 {dimension_numbers = #tpu.dot_dimension_numbers<[1], [0], [0], [1], [0, 0, 1, 1], [], []>} : vector<8x16xf32>, vector<16x8xf32>, vector<8x8xf32> -> vector<8x8xf32>
    %80 = tpu.reciprocal %77 {approx = true} : vector<8x1xf32> -> vector<8x1xf32>
    %81 = arith.mulf %77, %80 : vector<8x1xf32>
    %cst_34 = arith.constant 2.000000e+00 : f32
    %82 = vector.broadcast %cst_34 : f32 to vector<8x1xf32>
    %83 = arith.subf %82, %81 : vector<8x1xf32>
    %84 = arith.mulf %80, %83 : vector<8x1xf32>
    %85 = vector.broadcast %84 : vector<8x1xf32> to vector<8x8xf32>
    %86 = arith.mulf %79, %85 : vector<8x8xf32>
    %87 = vector.extract_strided_slice %17 {offsets = [16, 0], sizes = [8, 32], strides = [1, 1]} : vector<32x32xf32> to vector<8x32xf32>
    %cst_35 = arith.constant dense<0.000000e+00> : vector<8x32xf32>
    %88 = tpu.matmul %86, %87, %cst_35 {dimension_numbers = #tpu.dot_dimension_numbers<[1], [0], [0], [1], [0, 0, 1, 1], [], []>} : vector<8x8xf32>, vector<8x32xf32>, vector<8x32xf32> -> vector<8x32xf32>
    %89 = arith.addf %67, %88 : vector<8x32xf32>
    %90 = vector.extract_strided_slice %20 {offsets = [0, 24], sizes = [8, 8], strides = [1, 1]} : vector<8x32xf32> to vector<8x8xf32>
    %91 = vector.extract_strided_slice %21 {offsets = [0, 24], sizes = [16, 8], strides = [1, 1]} : vector<16x32xf32> to vector<16x8xf32>
    %cst_36 = arith.constant dense<0.000000e+00> : vector<8x16xf32>
    %92 = tpu.matmul %90, %91, %cst_36 {dimension_numbers = #tpu.dot_dimension_numbers<[1], [1], [0], [0], [0, 0, 1, 0], [], []>} : vector<8x8xf32>, vector<16x8xf32>, vector<8x16xf32> -> vector<8x16xf32>
    %cst_37 = arith.constant dense<0xFF800000> : vector<8xf32>
    %93 = vector.multi_reduction <maximumf>, %92, %cst_37 [1] : vector<8x16xf32> to vector<8xf32>
    %94 = vector.shape_cast %93 : vector<8xf32> to vector<8x1xf32>
    %95 = vector.broadcast %94 : vector<8x1xf32> to vector<8x16xf32>
    %96 = arith.subf %92, %95 : vector<8x16xf32>
    %97 = math.exp %96 : vector<8x16xf32>
    %cst_38 = arith.constant dense<0.000000e+00> : vector<8xf32>
    %98 = vector.multi_reduction <add>, %97, %cst_38 [1] : vector<8x16xf32> to vector<8xf32>
    %99 = vector.shape_cast %98 : vector<8xf32> to vector<8x1xf32>
    %100 = vector.extract_strided_slice %22 {offsets = [0, 24], sizes = [16, 8], strides = [1, 1]} : vector<16x32xf32> to vector<16x8xf32>
    %cst_39 = arith.constant dense<0.000000e+00> : vector<8x8xf32>
    %101 = tpu.matmul %97, %100, %cst_39 {dimension_numbers = #tpu.dot_dimension_numbers<[1], [0], [0], [1], [0, 0, 1, 1], [], []>} : vector<8x16xf32>, vector<16x8xf32>, vector<8x8xf32> -> vector<8x8xf32>
    %102 = tpu.reciprocal %99 {approx = true} : vector<8x1xf32> -> vector<8x1xf32>
    %103 = arith.mulf %99, %102 : vector<8x1xf32>
    %cst_40 = arith.constant 2.000000e+00 : f32
    %104 = vector.broadcast %cst_40 : f32 to vector<8x1xf32>
    %105 = arith.subf %104, %103 : vector<8x1xf32>
    %106 = arith.mulf %102, %105 : vector<8x1xf32>
    %107 = vector.broadcast %106 : vector<8x1xf32> to vector<8x8xf32>
    %108 = arith.mulf %101, %107 : vector<8x8xf32>
    %109 = vector.extract_strided_slice %17 {offsets = [24, 0], sizes = [8, 32], strides = [1, 1]} : vector<32x32xf32> to vector<8x32xf32>
    %cst_41 = arith.constant dense<0.000000e+00> : vector<8x32xf32>
    %110 = tpu.matmul %108, %109, %cst_41 {dimension_numbers = #tpu.dot_dimension_numbers<[1], [0], [0], [1], [0, 0, 1, 1], [], []>} : vector<8x8xf32>, vector<8x32xf32>, vector<8x32xf32> -> vector<8x32xf32>
    %111 = arith.addf %89, %110 : vector<8x32xf32>
    %112 = vector.extract_strided_slice %14 {offsets = [8, 0], sizes = [8, 32], strides = [1, 1]} : vector<16x32xf32> to vector<8x32xf32>
    %113 = vector.extract_strided_slice %15 {offsets = [16, 0], sizes = [16, 32], strides = [1, 1]} : vector<32x32xf32> to vector<16x32xf32>
    %114 = vector.extract_strided_slice %16 {offsets = [16, 0], sizes = [16, 32], strides = [1, 1]} : vector<32x32xf32> to vector<16x32xf32>
    %cst_42 = arith.constant 0.000000e+00 : f32
    %115 = vector.broadcast %cst_42 : f32 to vector<8x32xf32>
    %116 = vector.extract_strided_slice %112 {offsets = [0, 0], sizes = [8, 8], strides = [1, 1]} : vector<8x32xf32> to vector<8x8xf32>
    %117 = vector.extract_strided_slice %113 {offsets = [0, 0], sizes = [16, 8], strides = [1, 1]} : vector<16x32xf32> to vector<16x8xf32>
    %cst_43 = arith.constant dense<0.000000e+00> : vector<8x16xf32>
    %118 = tpu.matmul %116, %117, %cst_43 {dimension_numbers = #tpu.dot_dimension_numbers<[1], [1], [0], [0], [0, 0, 1, 0], [], []>} : vector<8x8xf32>, vector<16x8xf32>, vector<8x16xf32> -> vector<8x16xf32>
    %cst_44 = arith.constant dense<0xFF800000> : vector<8xf32>
    %119 = vector.multi_reduction <maximumf>, %118, %cst_44 [1] : vector<8x16xf32> to vector<8xf32>
    %120 = vector.shape_cast %119 : vector<8xf32> to vector<8x1xf32>
    %121 = vector.broadcast %120 : vector<8x1xf32> to vector<8x16xf32>
    %122 = arith.subf %118, %121 : vector<8x16xf32>
    %123 = math.exp %122 : vector<8x16xf32>
    %cst_45 = arith.constant dense<0.000000e+00> : vector<8xf32>
    %124 = vector.multi_reduction <add>, %123, %cst_45 [1] : vector<8x16xf32> to vector<8xf32>
    %125 = vector.shape_cast %124 : vector<8xf32> to vector<8x1xf32>
    %126 = vector.extract_strided_slice %114 {offsets = [0, 0], sizes = [16, 8], strides = [1, 1]} : vector<16x32xf32> to vector<16x8xf32>
    %cst_46 = arith.constant dense<0.000000e+00> : vector<8x8xf32>
    %127 = tpu.matmul %123, %126, %cst_46 {dimension_numbers = #tpu.dot_dimension_numbers<[1], [0], [0], [1], [0, 0, 1, 1], [], []>} : vector<8x16xf32>, vector<16x8xf32>, vector<8x8xf32> -> vector<8x8xf32>
    %128 = tpu.reciprocal %125 {approx = true} : vector<8x1xf32> -> vector<8x1xf32>
    %129 = arith.mulf %125, %128 : vector<8x1xf32>
    %cst_47 = arith.constant 2.000000e+00 : f32
    %130 = vector.broadcast %cst_47 : f32 to vector<8x1xf32>
    %131 = arith.subf %130, %129 : vector<8x1xf32>
    %132 = arith.mulf %128, %131 : vector<8x1xf32>
    %133 = vector.broadcast %132 : vector<8x1xf32> to vector<8x8xf32>
    %134 = arith.mulf %127, %133 : vector<8x8xf32>
    %135 = vector.extract_strided_slice %17 {offsets = [0, 0], sizes = [8, 32], strides = [1, 1]} : vector<32x32xf32> to vector<8x32xf32>
    %cst_48 = arith.constant dense<0.000000e+00> : vector<8x32xf32>
    %136 = tpu.matmul %134, %135, %cst_48 {dimension_numbers = #tpu.dot_dimension_numbers<[1], [0], [0], [1], [0, 0, 1, 1], [], []>} : vector<8x8xf32>, vector<8x32xf32>, vector<8x32xf32> -> vector<8x32xf32>
    %137 = arith.addf %115, %136 : vector<8x32xf32>
    %138 = vector.extract_strided_slice %112 {offsets = [0, 8], sizes = [8, 8], strides = [1, 1]} : vector<8x32xf32> to vector<8x8xf32>
    %139 = vector.extract_strided_slice %113 {offsets = [0, 8], sizes = [16, 8], strides = [1, 1]} : vector<16x32xf32> to vector<16x8xf32>
    %cst_49 = arith.constant dense<0.000000e+00> : vector<8x16xf32>
    %140 = tpu.matmul %138, %139, %cst_49 {dimension_numbers = #tpu.dot_dimension_numbers<[1], [1], [0], [0], [0, 0, 1, 0], [], []>} : vector<8x8xf32>, vector<16x8xf32>, vector<8x16xf32> -> vector<8x16xf32>
    %cst_50 = arith.constant dense<0xFF800000> : vector<8xf32>
    %141 = vector.multi_reduction <maximumf>, %140, %cst_50 [1] : vector<8x16xf32> to vector<8xf32>
    %142 = vector.shape_cast %141 : vector<8xf32> to vector<8x1xf32>
    %143 = vector.broadcast %142 : vector<8x1xf32> to vector<8x16xf32>
    %144 = arith.subf %140, %143 : vector<8x16xf32>
    %145 = math.exp %144 : vector<8x16xf32>
    %cst_51 = arith.constant dense<0.000000e+00> : vector<8xf32>
    %146 = vector.multi_reduction <add>, %145, %cst_51 [1] : vector<8x16xf32> to vector<8xf32>
    %147 = vector.shape_cast %146 : vector<8xf32> to vector<8x1xf32>
    %148 = vector.extract_strided_slice %114 {offsets = [0, 8], sizes = [16, 8], strides = [1, 1]} : vector<16x32xf32> to vector<16x8xf32>
    %cst_52 = arith.constant dense<0.000000e+00> : vector<8x8xf32>
    %149 = tpu.matmul %145, %148, %cst_52 {dimension_numbers = #tpu.dot_dimension_numbers<[1], [0], [0], [1], [0, 0, 1, 1], [], []>} : vector<8x16xf32>, vector<16x8xf32>, vector<8x8xf32> -> vector<8x8xf32>
    %150 = tpu.reciprocal %147 {approx = true} : vector<8x1xf32> -> vector<8x1xf32>
    %151 = arith.mulf %147, %150 : vector<8x1xf32>
    %cst_53 = arith.constant 2.000000e+00 : f32
    %152 = vector.broadcast %cst_53 : f32 to vector<8x1xf32>
    %153 = arith.subf %152, %151 : vector<8x1xf32>
    %154 = arith.mulf %150, %153 : vector<8x1xf32>
    %155 = vector.broadcast %154 : vector<8x1xf32> to vector<8x8xf32>
    %156 = arith.mulf %149, %155 : vector<8x8xf32>
    %157 = vector.extract_strided_slice %17 {offsets = [8, 0], sizes = [8, 32], strides = [1, 1]} : vector<32x32xf32> to vector<8x32xf32>
    %cst_54 = arith.constant dense<0.000000e+00> : vector<8x32xf32>
    %158 = tpu.matmul %156, %157, %cst_54 {dimension_numbers = #tpu.dot_dimension_numbers<[1], [0], [0], [1], [0, 0, 1, 1], [], []>} : vector<8x8xf32>, vector<8x32xf32>, vector<8x32xf32> -> vector<8x32xf32>
    %159 = arith.addf %137, %158 : vector<8x32xf32>
    %160 = vector.extract_strided_slice %112 {offsets = [0, 16], sizes = [8, 8], strides = [1, 1]} : vector<8x32xf32> to vector<8x8xf32>
    %161 = vector.extract_strided_slice %113 {offsets = [0, 16], sizes = [16, 8], strides = [1, 1]} : vector<16x32xf32> to vector<16x8xf32>
    %cst_55 = arith.constant dense<0.000000e+00> : vector<8x16xf32>
    %162 = tpu.matmul %160, %161, %cst_55 {dimension_numbers = #tpu.dot_dimension_numbers<[1], [1], [0], [0], [0, 0, 1, 0], [], []>} : vector<8x8xf32>, vector<16x8xf32>, vector<8x16xf32> -> vector<8x16xf32>
    %cst_56 = arith.constant dense<0xFF800000> : vector<8xf32>
    %163 = vector.multi_reduction <maximumf>, %162, %cst_56 [1] : vector<8x16xf32> to vector<8xf32>
    %164 = vector.shape_cast %163 : vector<8xf32> to vector<8x1xf32>
    %165 = vector.broadcast %164 : vector<8x1xf32> to vector<8x16xf32>
    %166 = arith.subf %162, %165 : vector<8x16xf32>
    %167 = math.exp %166 : vector<8x16xf32>
    %cst_57 = arith.constant dense<0.000000e+00> : vector<8xf32>
    %168 = vector.multi_reduction <add>, %167, %cst_57 [1] : vector<8x16xf32> to vector<8xf32>
    %169 = vector.shape_cast %168 : vector<8xf32> to vector<8x1xf32>
    %170 = vector.extract_strided_slice %114 {offsets = [0, 16], sizes = [16, 8], strides = [1, 1]} : vector<16x32xf32> to vector<16x8xf32>
    %cst_58 = arith.constant dense<0.000000e+00> : vector<8x8xf32>
    %171 = tpu.matmul %167, %170, %cst_58 {dimension_numbers = #tpu.dot_dimension_numbers<[1], [0], [0], [1], [0, 0, 1, 1], [], []>} : vector<8x16xf32>, vector<16x8xf32>, vector<8x8xf32> -> vector<8x8xf32>
    %172 = tpu.reciprocal %169 {approx = true} : vector<8x1xf32> -> vector<8x1xf32>
    %173 = arith.mulf %169, %172 : vector<8x1xf32>
    %cst_59 = arith.constant 2.000000e+00 : f32
    %174 = vector.broadcast %cst_59 : f32 to vector<8x1xf32>
    %175 = arith.subf %174, %173 : vector<8x1xf32>
    %176 = arith.mulf %172, %175 : vector<8x1xf32>
    %177 = vector.broadcast %176 : vector<8x1xf32> to vector<8x8xf32>
    %178 = arith.mulf %171, %177 : vector<8x8xf32>
    %179 = vector.extract_strided_slice %17 {offsets = [16, 0], sizes = [8, 32], strides = [1, 1]} : vector<32x32xf32> to vector<8x32xf32>
    %cst_60 = arith.constant dense<0.000000e+00> : vector<8x32xf32>
    %180 = tpu.matmul %178, %179, %cst_60 {dimension_numbers = #tpu.dot_dimension_numbers<[1], [0], [0], [1], [0, 0, 1, 1], [], []>} : vector<8x8xf32>, vector<8x32xf32>, vector<8x32xf32> -> vector<8x32xf32>
    %181 = arith.addf %159, %180 : vector<8x32xf32>
    %182 = vector.extract_strided_slice %112 {offsets = [0, 24], sizes = [8, 8], strides = [1, 1]} : vector<8x32xf32> to vector<8x8xf32>
    %183 = vector.extract_strided_slice %113 {offsets = [0, 24], sizes = [16, 8], strides = [1, 1]} : vector<16x32xf32> to vector<16x8xf32>
    %cst_61 = arith.constant dense<0.000000e+00> : vector<8x16xf32>
    %184 = tpu.matmul %182, %183, %cst_61 {dimension_numbers = #tpu.dot_dimension_numbers<[1], [1], [0], [0], [0, 0, 1, 0], [], []>} : vector<8x8xf32>, vector<16x8xf32>, vector<8x16xf32> -> vector<8x16xf32>
    %cst_62 = arith.constant dense<0xFF800000> : vector<8xf32>
    %185 = vector.multi_reduction <maximumf>, %184, %cst_62 [1] : vector<8x16xf32> to vector<8xf32>
    %186 = vector.shape_cast %185 : vector<8xf32> to vector<8x1xf32>
    %187 = vector.broadcast %186 : vector<8x1xf32> to vector<8x16xf32>
    %188 = arith.subf %184, %187 : vector<8x16xf32>
    %189 = math.exp %188 : vector<8x16xf32>
    %cst_63 = arith.constant dense<0.000000e+00> : vector<8xf32>
    %190 = vector.multi_reduction <add>, %189, %cst_63 [1] : vector<8x16xf32> to vector<8xf32>
    %191 = vector.shape_cast %190 : vector<8xf32> to vector<8x1xf32>
    %192 = vector.extract_strided_slice %114 {offsets = [0, 24], sizes = [16, 8], strides = [1, 1]} : vector<16x32xf32> to vector<16x8xf32>
    %cst_64 = arith.constant dense<0.000000e+00> : vector<8x8xf32>
    %193 = tpu.matmul %189, %192, %cst_64 {dimension_numbers = #tpu.dot_dimension_numbers<[1], [0], [0], [1], [0, 0, 1, 1], [], []>} : vector<8x16xf32>, vector<16x8xf32>, vector<8x8xf32> -> vector<8x8xf32>
    %194 = tpu.reciprocal %191 {approx = true} : vector<8x1xf32> -> vector<8x1xf32>
    %195 = arith.mulf %191, %194 : vector<8x1xf32>
    %cst_65 = arith.constant 2.000000e+00 : f32
    %196 = vector.broadcast %cst_65 : f32 to vector<8x1xf32>
    %197 = arith.subf %196, %195 : vector<8x1xf32>
    %198 = arith.mulf %194, %197 : vector<8x1xf32>
    %199 = vector.broadcast %198 : vector<8x1xf32> to vector<8x8xf32>
    %200 = arith.mulf %193, %199 : vector<8x8xf32>
    %201 = vector.extract_strided_slice %17 {offsets = [24, 0], sizes = [8, 32], strides = [1, 1]} : vector<32x32xf32> to vector<8x32xf32>
    %cst_66 = arith.constant dense<0.000000e+00> : vector<8x32xf32>
    %202 = tpu.matmul %200, %201, %cst_66 {dimension_numbers = #tpu.dot_dimension_numbers<[1], [0], [0], [1], [0, 0, 1, 1], [], []>} : vector<8x8xf32>, vector<8x32xf32>, vector<8x32xf32> -> vector<8x32xf32>
    %203 = arith.addf %181, %202 : vector<8x32xf32>
    %204 = tpu.concatenate %111, %203 in 0 : vector<8x32xf32>, vector<8x32xf32> -> vector<16x32xf32>
    %205 = arith.addf %0, %204 : vector<16x32xf32>
    %c0_67 = arith.constant 0 : index
    %c0_68 = arith.constant 0 : index
    %206 = vector.load %arg7[%c0_67, %c0_68] : memref<1x32xf32, #tpu.memory_space<vmem>>, vector<1x32xf32>
    %207 = vector.broadcast %206 : vector<1x32xf32> to vector<16x32xf32>
    %208 = arith.addf %205, %207 : vector<16x32xf32>
    %cst_69 = arith.constant dense<0.000000e+00> : vector<16xf32>
    %209 = vector.multi_reduction <add>, %208, %cst_69 [1] : vector<16x32xf32> to vector<16xf32>
    %210 = vector.shape_cast %209 : vector<16xf32> to vector<16x1xf32>
    %cst_70 = arith.constant 3.200000e+01 : f32
    %211 = vector.broadcast %cst_70 : f32 to vector<16x1xf32>
    %212 = arith.divf %210, %211 : vector<16x1xf32>
    %213 = vector.broadcast %212 : vector<16x1xf32> to vector<16x32xf32>
    %214 = arith.subf %208, %213 : vector<16x32xf32>
    %215 = arith.mulf %214, %214 : vector<16x32xf32>
    %cst_71 = arith.constant dense<0.000000e+00> : vector<16xf32>
    %216 = vector.multi_reduction <add>, %215, %cst_71 [1] : vector<16x32xf32> to vector<16xf32>
    %217 = vector.shape_cast %216 : vector<16xf32> to vector<16x1xf32>
    %cst_72 = arith.constant 3.200000e+01 : f32
    %218 = vector.broadcast %cst_72 : f32 to vector<16x1xf32>
    %219 = arith.divf %217, %218 : vector<16x1xf32>
    %cst_73 = arith.constant 9.99999974E-6 : f32
    %220 = vector.broadcast %cst_73 : f32 to vector<16x1xf32>
    %221 = arith.addf %219, %220 : vector<16x1xf32>
    %222 = math.rsqrt %221 : vector<16x1xf32>
    %223 = vector.broadcast %222 : vector<16x1xf32> to vector<16x32xf32>
    %224 = arith.mulf %214, %223 : vector<16x32xf32>
    %225 = vector.broadcast %18 : vector<1x32xf32> to vector<16x32xf32>
    %226 = arith.mulf %224, %225 : vector<16x32xf32>
    %227 = vector.broadcast %19 : vector<1x32xf32> to vector<16x32xf32>
    %228 = arith.addf %226, %227 : vector<16x32xf32>
    %c0_74 = arith.constant 0 : index
    %c0_75 = arith.constant 0 : index
    %229 = vector.load %arg9[%c0_74, %c0_75] : memref<16x32xf32, #tpu.memory_space<vmem>>, vector<16x32xf32>
    tpu.vector_store %arg9[%c0_74, %c0_75], %228 {strides = array<i32>} : memref<16x32xf32, #tpu.memory_space<vmem>>, vector<16x32xf32>,
    return
  }
}

</mosaic_0001>

<llo_original>
// kernel: cross_attention_layer.1
$region0: #{cross_attention_layer.1}
  #allocation0 [shape = 'u32[]', space=smem, size = 0x4, offset = 0x4, fixed_abs, tag = 'smem constant byte address 0x4 - core index']
  #allocation1 [shape = 'u32[144,128]{1,0:T(1,128)}', space=vmem, size = 0x12000, scoped, tag = 'internal scratch']
  %s0 = inlined_call_operand.vmem [shape: f32[16,32], index: 0, kind: input, shape index: {}]
  %s1 = inlined_call_operand.vmem [shape: f32[16,32], index: 1, kind: input, shape index: {}]
  %s2 = inlined_call_operand.vmem [shape: f32[32,32], index: 2, kind: input, shape index: {}]
  %s3 = inlined_call_operand.vmem [shape: f32[32,32], index: 3, kind: input, shape index: {}]
  %s4 = inlined_call_operand.vmem [shape: f32[32,96], index: 4, kind: input, shape index: {}]
  %s5 = inlined_call_operand.vmem [shape: f32[1,96], index: 5, kind: input, shape index: {}]
  %s6 = inlined_call_operand.vmem [shape: f32[32,32], index: 6, kind: input, shape index: {}]
  %s7 = inlined_call_operand.vmem [shape: f32[1,32], index: 7, kind: input, shape index: {}]
  %s8 = inlined_call_operand.vmem [shape: f32[2,32], index: 8, kind: input, shape index: {}]
  %s9 = inlined_call_operand.vmem [shape: f32[16,32], index: 9, kind: output, shape index: {}]
  %s10 = sld [smem:[#allocation0]]
  $region46: #{cross_attention_layer.1} parent=0
    _
  %s12 = ssub.s32 1, %s10
  %s13 = scalar_select 0, %s12, %s10
  // Predicated region
  $region2: #{cross_attention_layer.1} parent=0 // pred_check
    _
  $region3: #{cross_attention_layer.1} parent=0 // pred_check_branch
    %15 = sbr.rel (0) target = $region5
  $region4: #{cross_attention_layer.1} parent=0 // pred_region
    _
  $region5: #{cross_attention_layer.1} parent=0 // pred_fallthru
    _
  // Predicated region
  $region6: #{cross_attention_layer.1} parent=0 // pred_check
    _
  $region7: #{cross_attention_layer.1} parent=0 // pred_check_branch
    %17 = sbr.rel (0) target = $region9
  $region8: #{cross_attention_layer.1} parent=0 // pred_region
    _
  $region9: #{cross_attention_layer.1} parent=0 // pred_fallthru
    _
  // Predicated region
  $region10: #{cross_attention_layer.1} parent=0 // pred_check
    _
  $region11: #{cross_attention_layer.1} parent=0 // pred_check_branch
    %19 = sbr.rel (0) target = $region13
  $region12: #{cross_attention_layer.1} parent=0 // pred_region
    _
  $region13: #{cross_attention_layer.1} parent=0 // pred_fallthru
    _
  // Predicated region
  $region14: #{cross_attention_layer.1} parent=0 // pred_check
    _
  $region15: #{cross_attention_layer.1} parent=0 // pred_check_branch
    %21 = sbr.rel (0) target = $region17
  $region16: #{cross_attention_layer.1} parent=0 // pred_region
    _
  $region17: #{cross_attention_layer.1} parent=0 // pred_fallthru
    _
  // Predicated region
  $region18: #{cross_attention_layer.1} parent=0 // pred_check
    _
  $region19: #{cross_attention_layer.1} parent=0 // pred_check_branch
    %23 = sbr.rel (0) target = $region21
  $region20: #{cross_attention_layer.1} parent=0 // pred_region
    _
  $region21: #{cross_attention_layer.1} parent=0 // pred_fallthru
    _
  // Predicated region
  $region22: #{cross_attention_layer.1} parent=0 // pred_check
    _
  $region23: #{cross_attention_layer.1} parent=0 // pred_check_branch
    %25 = sbr.rel (0) target = $region25
  $region24: #{cross_attention_layer.1} parent=0 // pred_region
    _
  $region25: #{cross_attention_layer.1} parent=0 // pred_fallthru
    _
  // Predicated region
  $region26: #{cross_attention_layer.1} parent=0 // pred_check
    _
  $region27: #{cross_attention_layer.1} parent=0 // pred_check_branch
    %27 = sbr.rel (0) target = $region29
  $region28: #{cross_attention_layer.1} parent=0 // pred_region
    _
  $region29: #{cross_attention_layer.1} parent=0 // pred_fallthru
    _
  // Predicated region
  $region30: #{cross_attention_layer.1} parent=0 // pred_check
    _
  $region31: #{cross_attention_layer.1} parent=0 // pred_check_branch
    %29 = sbr.rel (0) target = $region33
  $region32: #{cross_attention_layer.1} parent=0 // pred_region
    _
  $region33: #{cross_attention_layer.1} parent=0 // pred_fallthru
    _
  // Predicated region
  $region34: #{cross_attention_layer.1} parent=0 // pred_check
    _
  $region35: #{cross_attention_layer.1} parent=0 // pred_check_branch
    %31 = sbr.rel (0) target = $region37
  $region36: #{cross_attention_layer.1} parent=0 // pred_region
    _
  $region37: #{cross_attention_layer.1} parent=0 // pred_fallthru
    _
  %v32 = vld [vmem:[%s0] sm:$0xff]
  %v33 = vld [vmem:[%s0 + $0x8] sm:$0xff]
  %v34 = vld [vmem:[%s1] sm:$0xff]
  %v35 = vld [vmem:[%s1 + $0x8] sm:$0xff]
  %v36 = vadd.f32 %v32, %v34
  %v37 = vadd.f32 %v33, %v35
  %v38 = vld [vmem:[%s2] sm:$0xff]
  %v39 = vld [vmem:[%s2 + $0x8] sm:$0xff]
  %v40 = vld [vmem:[%s2 + $0x10] sm:$0xff]
  %v41 = vld [vmem:[%s2 + $0x18] sm:$0xff]
  %v42 = vld [vmem:[%s3] sm:$0xff]
  %v43 = vld [vmem:[%s3 + $0x8] sm:$0xff]
  %v44 = vld [vmem:[%s3 + $0x10] sm:$0xff]
  %v45 = vld [vmem:[%s3 + $0x18] sm:$0xff]
  %v46 = vadd.f32 %v38, %v42
  %v47 = vadd.f32 %v39, %v43
  %v48 = vadd.f32 %v40, %v44
  %v49 = vadd.f32 %v41, %v45
  %v50 = vld [vmem:[%s4] sm:$0xff]
  %v51 = vld [vmem:[%s4 + $0x8] sm:$0xff]
  %v52 = vld [vmem:[%s4 + $0x10] sm:$0xff]
  %v53 = vld [vmem:[%s4 + $0x18] sm:$0xff]
  %v54 = vld [vmem:[%s5] sm:$0x1]
  %v56 = vlaneseq
  %v57 = vshrl.u32 %v56, 7
  %v58 = vsub.s32 0, %v57
  %v59 = vrot.slane %v54, %v58
  %vm61 = vcmask 261120
  %v63 = vsel %vm61, %v36, 0
  %v66 = vsel %vm61, %v37, 0
  %v69 = vsel %vm61, %v46, 0
  %v72 = vsel %vm61, %v47, 0
  %v75 = vsel %vm61, %v48, 0
  %v78 = vsel %vm61, %v49, 0
  %v81 = vsel %vm61, %v38, 0
  %v84 = vsel %vm61, %v39, 0
  %v87 = vsel %vm61, %v40, 0
  %v90 = vsel %vm61, %v41, 0
  %92 = vmatprep.subr.mxu0 0.0
  %93 = vmatpush1.msra.mxu0 %v50
  %94 = vmatprep.subr.mxu0 0.0
  %95 = vmatpush1.msra.mxu0 %v51
  %96 = vmatprep.subr.mxu0 0.0
  %97 = vmatpush1.msra.mxu0 %v52
  %98 = vmatprep.subr.mxu0 0.0
  %99 = vmatpush1.msra.mxu0 %v53
  %100 = vmatprep.subr.mxu0 0.0
  %101 = vmatpush1.msra.mxu0 0.0
  %102 = vmatprep.subr.mxu0 0.0
  %103 = vmatpush1.msra.mxu0 0.0
  %104 = vmatprep.subr.mxu0 0.0
  %105 = vmatpush1.msra.mxu0 0.0
  %106 = vmatprep.subr.mxu0 0.0
  %107 = vmatpush1.msra.mxu0 0.0
  %108 = vmatprep.subr.mxu0 0.0
  %109 = vmatpush1.msra.mxu0 0.0
  %110 = vmatprep.subr.mxu0 0.0
  %111 = vmatpush1.msra.mxu0 0.0
  %112 = vmatprep.subr.mxu0 0.0
  %113 = vmatpush1.msra.mxu0 0.0
  %114 = vmatprep.subr.mxu0 0.0
  %115 = vmatpush1.msra.mxu0 0.0
  %116 = vmatprep.subr.mxu0 0.0
  %117 = vmatpush1.msra.mxu0 0.0
  %118 = vmatprep.subr.mxu0 0.0
  %119 = vmatpush1.msra.mxu0 0.0
  %120 = vmatprep.subr.mxu0 0.0
  %121 = vmatpush1.msra.mxu0 0.0
  %122 = vmatprep.subr.mxu0 0.0
  %123 = vmatpush1.msra.mxu0 0.0
  %124 = vmatprep.subr.mxu0 0.0
  %125 = vmatpush1.msra.mxu0 0.0
  %126 = vmatprep.subr.mxu0 0.0
  %127 = vmatpush1.msra.mxu0 0.0
  %128 = vmatprep.subr.mxu0 0.0
  %129 = vmatpush1.msra.mxu0 0.0
  %130 = vmatprep.subr.mxu0 0.0
  %131 = vmatpush1.msra.mxu0 0.0
  %132 = vmatprep.subr.mxu0 0.0
  %133 = vmatpush1.msra.mxu0 0.0
  %134 = vmatprep.subr.mxu0 0.0
  %135 = vmatpush1.msra.mxu0 0.0
  %136 = vmatprep.subr.mxu0 0.0
  %137 = vmatpush1.msra.mxu0 0.0
  %138 = vmatprep.subr.mxu0 0.0
  %139 = vmatpush1.msra.mxu0 0.0
  %140 = vmatprep.subr.mxu0 0.0
  %141 = vmatpush1.msra.mxu0 0.0
  %142 = vmatprep.subr.mxu0 0.0
  %143 = vmatpush1.msra.mxu0 0.0
  %144 = vmatprep.subr.mxu0 0.0
  %145 = vmatpush1.msra.mxu0 0.0
  %146 = vmatprep.subr.mxu0 0.0
  %147 = vmatpush1.msra.mxu0 0.0
  %148 = vmatprep.subr.mxu0 0.0
  %149 = vmatpush1.msra.mxu0 0.0
  %150 = vmatprep.subr.mxu0 0.0
  %151 = vmatpush1.msra.mxu0 0.0
  %152 = vmatprep.subr.mxu0 0.0
  %153 = vmatpush1.msra.mxu0 0.0
  %154 = vmatprep.subr.mxu0 0.0
  %155 = vmatpush1.msra.mxu0 0.0
  %156 = vmatprep.mubr.f32.mxu0 0.0
  %157 = vmatmul.mubr.f32.gmra.mrb[0].mxu0 %v63
  %v158 = vpop.f32.mrb[0].mxu0
  %v159 = vadd.f32 %v59, %v158
  %v160 = vpop.f32.mrb[0].mxu0
  %161 = vmatprep.mubr.f32.mxu0 0.0
  %162 = vmatmul.mubr.f32.gmra.mrb[0].mxu0 %v66
  %v163 = vpop.f32.mrb[0].mxu0
  %v164 = vadd.f32 %v59, %v163
  %v165 = vpop.f32.mrb[0].mxu0
  %166 = vmatprep.mubr.f32.mxu0 0.0
  %167 = vmatmul.mubr.f32.gmra.mrb[0].mxu0 %v69
  %v168 = vpop.f32.mrb[0].mxu0
  %v169 = vadd.f32 %v59, %v168
  %v170 = vpop.f32.mrb[0].mxu0
  %171 = vmatprep.mubr.f32.mxu0 0.0
  %172 = vmatmul.mubr.f32.gmra.mrb[0].mxu0 %v72
  %v173 = vpop.f32.mrb[0].mxu0
  %v174 = vadd.f32 %v59, %v173
  %v175 = vpop.f32.mrb[0].mxu0
  %176 = vmatprep.mubr.f32.mxu0 0.0
  %177 = vmatmul.mubr.f32.gmra.mrb[0].mxu0 %v75
  %v178 = vpop.f32.mrb[0].mxu0
  %v179 = vadd.f32 %v59, %v178
  %v180 = vpop.f32.mrb[0].mxu0
  %181 = vmatprep.mubr.f32.mxu0 0.0
  %182 = vmatmul.mubr.f32.gmra.mrb[0].mxu0 %v78
  %v183 = vpop.f32.mrb[0].mxu0
  %v184 = vadd.f32 %v59, %v183
  %v185 = vpop.f32.mrb[0].mxu0
  %186 = vmatprep.mubr.f32.mxu0 0.0
  %187 = vmatmul.mubr.f32.gmra.mrb[0].mxu0 %v81
  %v188 = vpop.f32.mrb[0].mxu0
  %v189 = vadd.f32 %v59, %v188
  %v190 = vpop.f32.mrb[0].mxu0
  %191 = vmatprep.mubr.f32.mxu0 0.0
  %192 = vmatmul.mubr.f32.gmra.mrb[0].mxu0 %v84
  %v193 = vpop.f32.mrb[0].mxu0
  %v194 = vadd.f32 %v59, %v193
  %v195 = vpop.f32.mrb[0].mxu0
  %196 = vmatprep.mubr.f32.mxu0 0.0
  %197 = vmatmul.mubr.f32.gmra.mrb[0].mxu0 %v87
  %v198 = vpop.f32.mrb[0].mxu0
  %v199 = vadd.f32 %v59, %v198
  %v200 = vpop.f32.mrb[0].mxu0
  %201 = vmatprep.mubr.f32.mxu0 0.0
  %202 = vmatmul.mubr.f32.gmra.mrb[0].mxu0 %v90
  %v203 = vpop.f32.mrb[0].mxu0
  %v204 = vadd.f32 %v59, %v203
  %v205 = vpop.f32.mrb[0].mxu0
  %206 = vdwg.mxu0
  %v207 = vmul.f32 %v159, 0.35355338
  %v208 = vmul.f32 %v164, 0.35355338
  %v209 = vld [vmem:[%s6] sm:$0xff]
  %v210 = vld [vmem:[%s6 + $0x8] sm:$0xff]
  %v211 = vld [vmem:[%s6 + $0x10] sm:$0xff]
  %v212 = vld [vmem:[%s6 + $0x18] sm:$0xff]
  %v213 = vld [vmem:[%s8] sm:$0x1]
  %v214 = vld [vmem:[%s8 + $0x1] sm:$0x1]
  %217 = vrot.lane.b32.xlu0 %v169, 96
  %v218 = vpop.permute.xlu0 %217
  %219 = vrot.lane.b32.xlu0 %v174, 96
  %v220 = vpop.permute.xlu0 %219
  %vm221 = vcmask 64512
  %v223 = vsel %vm221, %v207, 0
  %v225 = vsel %vm221, %v218, 0
  %v227 = vsel %vm221, %v220, 0
  %229 = vmatprep.subr.mxu0 0.0
  %230 = vmatpush1.xpose.msra.mxu0 %v225
  %231 = vmatprep.subr.mxu0 0.0
  %232 = vmatpush1.xpose.msra.mxu0 %v227
  %233 = vmatprep.subr.mxu0 0.0
  %234 = vmatpush1.xpose.msra.mxu0 0.0
  %235 = vmatprep.subr.mxu0 0.0
  %236 = vmatpush1.xpose.msra.mxu0 0.0
  %237 = vmatprep.subr.mxu0 0.0
  %238 = vmatpush1.xpose.msra.mxu0 0.0
  %239 = vmatprep.subr.mxu0 0.0
  %240 = vmatpush1.xpose.msra.mxu0 0.0
  %241 = vmatprep.subr.mxu0 0.0
  %242 = vmatpush1.xpose.msra.mxu0 0.0
  %243 = vmatprep.subr.mxu0 0.0
  %244 = vmatpush1.xpose.msra.mxu0 0.0
  %245 = vmatprep.subr.mxu0 0.0
  %246 = vmatpush1.xpose.msra.mxu0 0.0
  %247 = vmatprep.subr.mxu0 0.0
  %248 = vmatpush1.xpose.msra.mxu0 0.0
  %249 = vmatprep.subr.mxu0 0.0
  %250 = vmatpush1.xpose.msra.mxu0 0.0
  %251 = vmatprep.subr.mxu0 0.0
  %252 = vmatpush1.xpose.msra.mxu0 0.0
  %253 = vmatprep.subr.mxu0 0.0
  %254 = vmatpush1.xpose.msra.mxu0 0.0
  %255 = vmatprep.subr.mxu0 0.0
  %256 = vmatpush1.xpose.msra.mxu0 0.0
  %257 = vmatprep.subr.mxu0 0.0
  %258 = vmatpush1.xpose.msra.mxu0 0.0
  %259 = vmatprep.subr.mxu0 0.0
  %260 = vmatpush1.xpose.msra.mxu0 0.0
  %261 = vmatprep.subr.mxu0 0.0
  %262 = vmatpush1.xpose.msra.mxu0 0.0
  %263 = vmatprep.subr.mxu0 0.0
  %264 = vmatpush1.xpose.msra.mxu0 0.0
  %265 = vmatprep.subr.mxu0 0.0
  %266 = vmatpush1.xpose.msra.mxu0 0.0
  %267 = vmatprep.subr.mxu0 0.0
  %268 = vmatpush1.xpose.msra.mxu0 0.0
  %269 = vmatprep.subr.mxu0 0.0
  %270 = vmatpush1.xpose.msra.mxu0 0.0
  %271 = vmatprep.subr.mxu0 0.0
  %272 = vmatpush1.xpose.msra.mxu0 0.0
  %273 = vmatprep.subr.mxu0 0.0
  %274 = vmatpush1.xpose.msra.mxu0 0.0
  %275 = vmatprep.subr.mxu0 0.0
  %276 = vmatpush1.xpose.msra.mxu0 0.0
  %277 = vmatprep.subr.mxu0 0.0
  %278 = vmatpush1.xpose.msra.mxu0 0.0
  %279 = vmatprep.subr.mxu0 0.0
  %280 = vmatpush1.xpose.msra.mxu0 0.0
  %281 = vmatprep.subr.mxu0 0.0
  %282 = vmatpush1.xpose.msra.mxu0 0.0
  %283 = vmatprep.subr.mxu0 0.0
  %284 = vmatpush1.xpose.msra.mxu0 0.0
  %285 = vmatprep.subr.mxu0 0.0
  %286 = vmatpush1.xpose.msra.mxu0 0.0
  %287 = vmatprep.subr.mxu0 0.0
  %288 = vmatpush1.xpose.msra.mxu0 0.0
  %289 = vmatprep.subr.mxu0 0.0
  %290 = vmatpush1.xpose.msra.mxu0 0.0
  %291 = vmatprep.subr.mxu0 0.0
  %292 = vmatpush1.xpose.msra.mxu0 0.0
  %293 = vmatprep.mubr.f32.mxu0 0.0
  %294 = vmatmul.mubr.f32.gmra.mrb[0].mxu0 %v223
  %v295 = vpop.f32.mrb[0].mxu0
  %v296 = vadd.f32 0.0, %v295
  %v297 = vpop.f32.mrb[0].mxu0
  %298 = vdwg.mxu0
  %vm299 = vcmask 130048
  %v300 = vsel %vm299, %v296, -inf
  %301 = vmax.xlane.f32.xlu0 %v300
  %v302 = vpop.xlane.xlu0 %301
  %v303 = vsub.f32 %v296, %v302
  %v304 = vmul.f32 %v303, 1.442695
  %v305 = vpow.pop %v304
  %v306 = vsel %vm299, %v305, 0.0
  %307 = vadd.xlane.f32.xlu0 %v306
  %v308 = vpop.xlane.xlu0 %307
  %311 = vrot.lane.b32.xlu0 %v189, 64
  %v312 = vpop.permute.xlu0 %311
  %313 = vrot.lane.b32.xlu0 %v194, 64
  %v314 = vpop.permute.xlu0 %313
  %v318 = vsel %vm299, %v305, 0
  %320 = vmatprep.subr.mxu0 0.0
  %321 = vmatpush1.msra.mxu0 %v312
  %322 = vmatprep.subr.mxu0 0.0
  %323 = vmatpush1.msra.mxu0 %v314
  %324 = vmatprep.subr.mxu0 0.0
  %325 = vmatpush1.msra.mxu0 0.0
  %326 = vmatprep.subr.mxu0 0.0
  %327 = vmatpush1.msra.mxu0 0.0
  %328 = vmatprep.subr.mxu0 0.0
  %329 = vmatpush1.msra.mxu0 0.0
  %330 = vmatprep.subr.mxu0 0.0
  %331 = vmatpush1.msra.mxu0 0.0
  %332 = vmatprep.subr.mxu0 0.0
  %333 = vmatpush1.msra.mxu0 0.0
  %334 = vmatprep.subr.mxu0 0.0
  %335 = vmatpush1.msra.mxu0 0.0
  %336 = vmatprep.subr.mxu0 0.0
  %337 = vmatpush1.msra.mxu0 0.0
  %338 = vmatprep.subr.mxu0 0.0
  %339 = vmatpush1.msra.mxu0 0.0
  %340 = vmatprep.subr.mxu0 0.0
  %341 = vmatpush1.msra.mxu0 0.0
  %342 = vmatprep.subr.mxu0 0.0
  %343 = vmatpush1.msra.mxu0 0.0
  %344 = vmatprep.subr.mxu0 0.0
  %345 = vmatpush1.msra.mxu0 0.0
  %346 = vmatprep.subr.mxu0 0.0
  %347 = vmatpush1.msra.mxu0 0.0
  %348 = vmatprep.subr.mxu0 0.0
  %349 = vmatpush1.msra.mxu0 0.0
  %350 = vmatprep.subr.mxu0 0.0
  %351 = vmatpush1.msra.mxu0 0.0
  %352 = vmatprep.subr.mxu0 0.0
  %353 = vmatpush1.msra.mxu0 0.0
  %354 = vmatprep.subr.mxu0 0.0
  %355 = vmatpush1.msra.mxu0 0.0
  %356 = vmatprep.subr.mxu0 0.0
  %357 = vmatpush1.msra.mxu0 0.0
  %358 = vmatprep.subr.mxu0 0.0
  %359 = vmatpush1.msra.mxu0 0.0
  %360 = vmatprep.subr.mxu0 0.0
  %361 = vmatpush1.msra.mxu0 0.0
  %362 = vmatprep.subr.mxu0 0.0
  %363 = vmatpush1.msra.mxu0 0.0
  %364 = vmatprep.subr.mxu0 0.0
  %365 = vmatpush1.msra.mxu0 0.0
  %366 = vmatprep.subr.mxu0 0.0
  %367 = vmatpush1.msra.mxu0 0.0
  %368 = vmatprep.subr.mxu0 0.0
  %369 = vmatpush1.msra.mxu0 0.0
  %370 = vmatprep.subr.mxu0 0.0
  %371 = vmatpush1.msra.mxu0 0.0
  %372 = vmatprep.subr.mxu0 0.0
  %373 = vmatpush1.msra.mxu0 0.0
  %374 = vmatprep.subr.mxu0 0.0
  %375 = vmatpush1.msra.mxu0 0.0
  %376 = vmatprep.subr.mxu0 0.0
  %377 = vmatpush1.msra.mxu0 0.0
  %378 = vmatprep.subr.mxu0 0.0
  %379 = vmatpush1.msra.mxu0 0.0
  %380 = vmatprep.subr.mxu0 0.0
  %381 = vmatpush1.msra.mxu0 0.0
  %382 = vmatprep.subr.mxu0 0.0
  %383 = vmatpush1.msra.mxu0 0.0
  %384 = vmatprep.mubr.f32.mxu0 0.0
  %385 = vmatmul.mubr.f32.gmra.mrb[0].mxu0 %v318
  %v386 = vpop.f32.mrb[0].mxu0
  %v387 = vadd.f32 0.0, %v386
  %v388 = vpop.f32.mrb[0].mxu0
  %389 = vdwg.mxu0
  %v390 = vrcp.pop %v308
  %v391 = vmul.f32 %v308, %v390
  %v392 = vsub.f32 2.0, %v391
  %v393 = vmul.f32 %v390, %v392
  %v394 = vmul.f32 %v387, %v393
  %395 = vrot.lane.b32.xlu0 %v207, 120
  %v396 = vpop.permute.xlu0 %395
  %397 = vrot.lane.b32.xlu0 %v169, 88
  %v398 = vpop.permute.xlu0 %397
  %399 = vrot.lane.b32.xlu0 %v174, 88
  %v400 = vpop.permute.xlu0 %399
  %v401 = vsel %vm221, %v396, 0
  %v403 = vsel %vm221, %v398, 0
  %v405 = vsel %vm221, %v400, 0
  %407 = vmatprep.subr.mxu0 0.0
  %408 = vmatpush1.xpose.msra.mxu0 %v403
  %409 = vmatprep.subr.mxu0 0.0
  %410 = vmatpush1.xpose.msra.mxu0 %v405
  %411 = vmatprep.subr.mxu0 0.0
  %412 = vmatpush1.xpose.msra.mxu0 0.0
  %413 = vmatprep.subr.mxu0 0.0
  %414 = vmatpush1.xpose.msra.mxu0 0.0
  %415 = vmatprep.subr.mxu0 0.0
  %416 = vmatpush1.xpose.msra.mxu0 0.0
  %417 = vmatprep.subr.mxu0 0.0
  %418 = vmatpush1.xpose.msra.mxu0 0.0
  %419 = vmatprep.subr.mxu0 0.0
  %420 = vmatpush1.xpose.msra.mxu0 0.0
  %421 = vmatprep.subr.mxu0 0.0
  %422 = vmatpush1.xpose.msra.mxu0 0.0
  %423 = vmatprep.subr.mxu0 0.0
  %424 = vmatpush1.xpose.msra.mxu0 0.0
  %425 = vmatprep.subr.mxu0 0.0
  %426 = vmatpush1.xpose.msra.mxu0 0.0
  %427 = vmatprep.subr.mxu0 0.0
  %428 = vmatpush1.xpose.msra.mxu0 0.0
  %429 = vmatprep.subr.mxu0 0.0
  %430 = vmatpush1.xpose.msra.mxu0 0.0
  %431 = vmatprep.subr.mxu0 0.0
  %432 = vmatpush1.xpose.msra.mxu0 0.0
  %433 = vmatprep.subr.mxu0 0.0
  %434 = vmatpush1.xpose.msra.mxu0 0.0
  %435 = vmatprep.subr.mxu0 0.0
  %436 = vmatpush1.xpose.msra.mxu0 0.0
  %437 = vmatprep.subr.mxu0 0.0
  %438 = vmatpush1.xpose.msra.mxu0 0.0
  %439 = vmatprep.subr.mxu0 0.0
  %440 = vmatpush1.xpose.msra.mxu0 0.0
  %441 = vmatprep.subr.mxu0 0.0
  %442 = vmatpush1.xpose.msra.mxu0 0.0
  %443 = vmatprep.subr.mxu0 0.0
  %444 = vmatpush1.xpose.msra.mxu0 0.0
  %445 = vmatprep.subr.mxu0 0.0
  %446 = vmatpush1.xpose.msra.mxu0 0.0
  %447 = vmatprep.subr.mxu0 0.0
  %448 = vmatpush1.xpose.msra.mxu0 0.0
  %449 = vmatprep.subr.mxu0 0.0
  %450 = vmatpush1.xpose.msra.mxu0 0.0
  %451 = vmatprep.subr.mxu0 0.0
  %452 = vmatpush1.xpose.msra.mxu0 0.0
  %453 = vmatprep.subr.mxu0 0.0
  %454 = vmatpush1.xpose.msra.mxu0 0.0
  %455 = vmatprep.subr.mxu0 0.0
  %456 = vmatpush1.xpose.msra.mxu0 0.0
  %457 = vmatprep.subr.mxu0 0.0
  %458 = vmatpush1.xpose.msra.mxu0 0.0
  %459 = vmatprep.subr.mxu0 0.0
  %460 = vmatpush1.xpose.msra.mxu0 0.0
  %461 = vmatprep.subr.mxu0 0.0
  %462 = vmatpush1.xpose.msra.mxu0 0.0
  %463 = vmatprep.subr.mxu0 0.0
  %464 = vmatpush1.xpose.msra.mxu0 0.0
  %465 = vmatprep.subr.mxu0 0.0
  %466 = vmatpush1.xpose.msra.mxu0 0.0
  %467 = vmatprep.subr.mxu0 0.0
  %468 = vmatpush1.xpose.msra.mxu0 0.0
  %469 = vmatprep.subr.mxu0 0.0
  %470 = vmatpush1.xpose.msra.mxu0 0.0
  %471 = vmatprep.mubr.f32.mxu0 0.0
  %472 = vmatmul.mubr.f32.gmra.mrb[0].mxu0 %v401
  %v473 = vpop.f32.mrb[0].mxu0
  %v474 = vadd.f32 0.0, %v473
  %v475 = vpop.f32.mrb[0].mxu0
  %476 = vdwg.mxu0
  %v477 = vsel %vm299, %v474, -inf
  %478 = vmax.xlane.f32.xlu0 %v477
  %v479 = vpop.xlane.xlu0 %478
  %v480 = vsub.f32 %v474, %v479
  %v481 = vmul.f32 %v480, 1.442695
  %v482 = vpow.pop %v481
  %v483 = vsel %vm299, %v482, 0.0
  %484 = vadd.xlane.f32.xlu0 %v483
  %v485 = vpop.xlane.xlu0 %484
  %486 = vrot.lane.b32.xlu0 %v189, 56
  %v487 = vpop.permute.xlu0 %486
  %488 = vrot.lane.b32.xlu0 %v194, 56
  %v489 = vpop.permute.xlu0 %488
  %v493 = vsel %vm299, %v482, 0
  %495 = vmatprep.subr.mxu0 0.0
  %496 = vmatpush1.msra.mxu0 %v487
  %497 = vmatprep.subr.mxu0 0.0
  %498 = vmatpush1.msra.mxu0 %v489
  %499 = vmatprep.subr.mxu0 0.0
  %500 = vmatpush1.msra.mxu0 0.0
  %501 = vmatprep.subr.mxu0 0.0
  %502 = vmatpush1.msra.mxu0 0.0
  %503 = vmatprep.subr.mxu0 0.0
  %504 = vmatpush1.msra.mxu0 0.0
  %505 = vmatprep.subr.mxu0 0.0
  %506 = vmatpush1.msra.mxu0 0.0
  %507 = vmatprep.subr.mxu0 0.0
  %508 = vmatpush1.msra.mxu0 0.0
  %509 = vmatprep.subr.mxu0 0.0
  %510 = vmatpush1.msra.mxu0 0.0
  %511 = vmatprep.subr.mxu0 0.0
  %512 = vmatpush1.msra.mxu0 0.0
  %513 = vmatprep.subr.mxu0 0.0
  %514 = vmatpush1.msra.mxu0 0.0
  %515 = vmatprep.subr.mxu0 0.0
  %516 = vmatpush1.msra.mxu0 0.0
  %517 = vmatprep.subr.mxu0 0.0
  %518 = vmatpush1.msra.mxu0 0.0
  %519 = vmatprep.subr.mxu0 0.0
  %520 = vmatpush1.msra.mxu0 0.0
  %521 = vmatprep.subr.mxu0 0.0
  %522 = vmatpush1.msra.mxu0 0.0
  %523 = vmatprep.subr.mxu0 0.0
  %524 = vmatpush1.msra.mxu0 0.0
  %525 = vmatprep.subr.mxu0 0.0
  %526 = vmatpush1.msra.mxu0 0.0
  %527 = vmatprep.subr.mxu0 0.0
  %528 = vmatpush1.msra.mxu0 0.0
  %529 = vmatprep.subr.mxu0 0.0
  %530 = vmatpush1.msra.mxu0 0.0
  %531 = vmatprep.subr.mxu0 0.0
  %532 = vmatpush1.msra.mxu0 0.0
  %533 = vmatprep.subr.mxu0 0.0
  %534 = vmatpush1.msra.mxu0 0.0
  %535 = vmatprep.subr.mxu0 0.0
  %536 = vmatpush1.msra.mxu0 0.0
  %537 = vmatprep.subr.mxu0 0.0
  %538 = vmatpush1.msra.mxu0 0.0
  %539 = vmatprep.subr.mxu0 0.0
  %540 = vmatpush1.msra.mxu0 0.0
  %541 = vmatprep.subr.mxu0 0.0
  %542 = vmatpush1.msra.mxu0 0.0
  %543 = vmatprep.subr.mxu0 0.0
  %544 = vmatpush1.msra.mxu0 0.0
  %545 = vmatprep.subr.mxu0 0.0
  %546 = vmatpush1.msra.mxu0 0.0
  %547 = vmatprep.subr.mxu0 0.0
  %548 = vmatpush1.msra.mxu0 0.0
  %549 = vmatprep.subr.mxu0 0.0
  %550 = vmatpush1.msra.mxu0 0.0
  %551 = vmatprep.subr.mxu0 0.0
  %552 = vmatpush1.msra.mxu0 0.0
  %553 = vmatprep.subr.mxu0 0.0
  %554 = vmatpush1.msra.mxu0 0.0
  %555 = vmatprep.subr.mxu0 0.0
  %556 = vmatpush1.msra.mxu0 0.0
  %557 = vmatprep.subr.mxu0 0.0
  %558 = vmatpush1.msra.mxu0 0.0
  %559 = vmatprep.mubr.f32.mxu0 0.0
  %560 = vmatmul.mubr.f32.gmra.mrb[0].mxu0 %v493
  %v561 = vpop.f32.mrb[0].mxu0
  %v562 = vadd.f32 0.0, %v561
  %v563 = vpop.f32.mrb[0].mxu0
  %564 = vdwg.mxu0
  %v565 = vrcp.pop %v485
  %v566 = vmul.f32 %v485, %v565
  %v567 = vsub.f32 2.0, %v566
  %v568 = vmul.f32 %v565, %v567
  %v569 = vmul.f32 %v562, %v568
  %v571 = vsel %vm221, %v569, 0
  %573 = vmatprep.subr.mxu0 0.0
  %574 = vmatpush1.msra.mxu0 %v210
  %575 = vmatprep.subr.mxu0 0.0
  %576 = vmatpush1.msra.mxu0 0.0
  %577 = vmatprep.subr.mxu0 0.0
  %578 = vmatpush1.msra.mxu0 0.0
  %579 = vmatprep.subr.mxu0 0.0
  %580 = vmatpush1.msra.mxu0 0.0
  %581 = vmatprep.subr.mxu0 0.0
  %582 = vmatpush1.msra.mxu0 0.0
  %583 = vmatprep.subr.mxu0 0.0
  %584 = vmatpush1.msra.mxu0 0.0
  %585 = vmatprep.subr.mxu0 0.0
  %586 = vmatpush1.msra.mxu0 0.0
  %587 = vmatprep.subr.mxu0 0.0
  %588 = vmatpush1.msra.mxu0 0.0
  %589 = vmatprep.subr.mxu0 0.0
  %590 = vmatpush1.msra.mxu0 0.0
  %591 = vmatprep.subr.mxu0 0.0
  %592 = vmatpush1.msra.mxu0 0.0
  %593 = vmatprep.subr.mxu0 0.0
  %594 = vmatpush1.msra.mxu0 0.0
  %595 = vmatprep.subr.mxu0 0.0
  %596 = vmatpush1.msra.mxu0 0.0
  %597 = vmatprep.subr.mxu0 0.0
  %598 = vmatpush1.msra.mxu0 0.0
  %599 = vmatprep.subr.mxu0 0.0
  %600 = vmatpush1.msra.mxu0 0.0
  %601 = vmatprep.subr.mxu0 0.0
  %602 = vmatpush1.msra.mxu0 0.0
  %603 = vmatprep.subr.mxu0 0.0
  %604 = vmatpush1.msra.mxu0 0.0
  %605 = vmatprep.subr.mxu0 0.0
  %606 = vmatpush1.msra.mxu0 0.0
  %607 = vmatprep.subr.mxu0 0.0
  %608 = vmatpush1.msra.mxu0 0.0
  %609 = vmatprep.subr.mxu0 0.0
  %610 = vmatpush1.msra.mxu0 0.0
  %611 = vmatprep.subr.mxu0 0.0
  %612 = vmatpush1.msra.mxu0 0.0
  %613 = vmatprep.subr.mxu0 0.0
  %614 = vmatpush1.msra.mxu0 0.0
  %615 = vmatprep.subr.mxu0 0.0
  %616 = vmatpush1.msra.mxu0 0.0
  %617 = vmatprep.subr.mxu0 0.0
  %618 = vmatpush1.msra.mxu0 0.0
  %619 = vmatprep.subr.mxu0 0.0
  %620 = vmatpush1.msra.mxu0 0.0
  %621 = vmatprep.subr.mxu0 0.0
  %622 = vmatpush1.msra.mxu0 0.0
  %623 = vmatprep.subr.mxu0 0.0
  %624 = vmatpush1.msra.mxu0 0.0
  %625 = vmatprep.subr.mxu0 0.0
  %626 = vmatpush1.msra.mxu0 0.0
  %627 = vmatprep.subr.mxu0 0.0
  %628 = vmatpush1.msra.mxu0 0.0
  %629 = vmatprep.subr.mxu0 0.0
  %630 = vmatpush1.msra.mxu0 0.0
  %631 = vmatprep.subr.mxu0 0.0
  %632 = vmatpush1.msra.mxu0 0.0
  %633 = vmatprep.subr.mxu0 0.0
  %634 = vmatpush1.msra.mxu0 0.0
  %635 = vmatprep.subr.mxu0 0.0
  %636 = vmatpush1.msra.mxu0 0.0
  %637 = vmatprep.mubr.f32.mxu0 0.0
  %638 = vmatmul.mubr.f32.gmra.mrb[0].mxu0 %v571
  %v639 = vpop.f32.mrb[0].mxu0
  %v640 = vadd.f32 0.0, %v639
  %v641 = vpop.f32.mrb[0].mxu0
  %642 = vdwg.mxu0
  %v644 = vsel %vm221, %v394, 0
  %646 = vmatprep.subr.mxu0 0.0
  %647 = vmatpush1.msra.mxu0 %v209
  %648 = vmatprep.subr.mxu0 0.0
  %649 = vmatpush1.msra.mxu0 0.0
  %650 = vmatprep.subr.mxu0 0.0
  %651 = vmatpush1.msra.mxu0 0.0
  %652 = vmatprep.subr.mxu0 0.0
  %653 = vmatpush1.msra.mxu0 0.0
  %654 = vmatprep.subr.mxu0 0.0
  %655 = vmatpush1.msra.mxu0 0.0
  %656 = vmatprep.subr.mxu0 0.0
  %657 = vmatpush1.msra.mxu0 0.0
  %658 = vmatprep.subr.mxu0 0.0
  %659 = vmatpush1.msra.mxu0 0.0
  %660 = vmatprep.subr.mxu0 0.0
  %661 = vmatpush1.msra.mxu0 0.0
  %662 = vmatprep.subr.mxu0 0.0
  %663 = vmatpush1.msra.mxu0 0.0
  %664 = vmatprep.subr.mxu0 0.0
  %665 = vmatpush1.msra.mxu0 0.0
  %666 = vmatprep.subr.mxu0 0.0
  %667 = vmatpush1.msra.mxu0 0.0
  %668 = vmatprep.subr.mxu0 0.0
  %669 = vmatpush1.msra.mxu0 0.0
  %670 = vmatprep.subr.mxu0 0.0
  %671 = vmatpush1.msra.mxu0 0.0
  %672 = vmatprep.subr.mxu0 0.0
  %673 = vmatpush1.msra.mxu0 0.0
  %674 = vmatprep.subr.mxu0 0.0
  %675 = vmatpush1.msra.mxu0 0.0
  %676 = vmatprep.subr.mxu0 0.0
  %677 = vmatpush1.msra.mxu0 0.0
  %678 = vmatprep.subr.mxu0 0.0
  %679 = vmatpush1.msra.mxu0 0.0
  %680 = vmatprep.subr.mxu0 0.0
  %681 = vmatpush1.msra.mxu0 0.0
  %682 = vmatprep.subr.mxu0 0.0
  %683 = vmatpush1.msra.mxu0 0.0
  %684 = vmatprep.subr.mxu0 0.0
  %685 = vmatpush1.msra.mxu0 0.0
  %686 = vmatprep.subr.mxu0 0.0
  %687 = vmatpush1.msra.mxu0 0.0
  %688 = vmatprep.subr.mxu0 0.0
  %689 = vmatpush1.msra.mxu0 0.0
  %690 = vmatprep.subr.mxu0 0.0
  %691 = vmatpush1.msra.mxu0 0.0
  %692 = vmatprep.subr.mxu0 0.0
  %693 = vmatpush1.msra.mxu0 0.0
  %694 = vmatprep.subr.mxu0 0.0
  %695 = vmatpush1.msra.mxu0 0.0
  %696 = vmatprep.subr.mxu0 0.0
  %697 = vmatpush1.msra.mxu0 0.0
  %698 = vmatprep.subr.mxu0 0.0
  %699 = vmatpush1.msra.mxu0 0.0
  %700 = vmatprep.subr.mxu0 0.0
  %701 = vmatpush1.msra.mxu0 0.0
  %702 = vmatprep.subr.mxu0 0.0
  %703 = vmatpush1.msra.mxu0 0.0
  %704 = vmatprep.subr.mxu0 0.0
  %705 = vmatpush1.msra.mxu0 0.0
  %706 = vmatprep.subr.mxu0 0.0
  %707 = vmatpush1.msra.mxu0 0.0
  %708 = vmatprep.subr.mxu0 0.0
  %709 = vmatpush1.msra.mxu0 0.0
  %710 = vmatprep.mubr.f32.mxu0 0.0
  %711 = vmatmul.mubr.f32.gmra.mrb[0].mxu0 %v644
  %v712 = vpop.f32.mrb[0].mxu0
  %v713 = vadd.f32 %v640, %v712
  %v714 = vpop.f32.mrb[0].mxu0
  %715 = vdwg.mxu0
  %716 = vrot.lane.b32.xlu0 %v207, 112
  %v717 = vpop.permute.xlu0 %716
  %718 = vrot.lane.b32.xlu0 %v169, 80
  %v719 = vpop.permute.xlu0 %718
  %720 = vrot.lane.b32.xlu0 %v174, 80
  %v721 = vpop.permute.xlu0 %720
  %v722 = vsel %vm221, %v717, 0
  %v724 = vsel %vm221, %v719, 0
  %v726 = vsel %vm221, %v721, 0
  %728 = vmatprep.subr.mxu0 0.0
  %729 = vmatpush1.xpose.msra.mxu0 %v724
  %730 = vmatprep.subr.mxu0 0.0
  %731 = vmatpush1.xpose.msra.mxu0 %v726
  %732 = vmatprep.subr.mxu0 0.0
  %733 = vmatpush1.xpose.msra.mxu0 0.0
  %734 = vmatprep.subr.mxu0 0.0
  %735 = vmatpush1.xpose.msra.mxu0 0.0
  %736 = vmatprep.subr.mxu0 0.0
  %737 = vmatpush1.xpose.msra.mxu0 0.0
  %738 = vmatprep.subr.mxu0 0.0
  %739 = vmatpush1.xpose.msra.mxu0 0.0
  %740 = vmatprep.subr.mxu0 0.0
  %741 = vmatpush1.xpose.msra.mxu0 0.0
  %742 = vmatprep.subr.mxu0 0.0
  %743 = vmatpush1.xpose.msra.mxu0 0.0
  %744 = vmatprep.subr.mxu0 0.0
  %745 = vmatpush1.xpose.msra.mxu0 0.0
  %746 = vmatprep.subr.mxu0 0.0
  %747 = vmatpush1.xpose.msra.mxu0 0.0
  %748 = vmatprep.subr.mxu0 0.0
  %749 = vmatpush1.xpose.msra.mxu0 0.0
  %750 = vmatprep.subr.mxu0 0.0
  %751 = vmatpush1.xpose.msra.mxu0 0.0
  %752 = vmatprep.subr.mxu0 0.0
  %753 = vmatpush1.xpose.msra.mxu0 0.0
  %754 = vmatprep.subr.mxu0 0.0
  %755 = vmatpush1.xpose.msra.mxu0 0.0
  %756 = vmatprep.subr.mxu0 0.0
  %757 = vmatpush1.xpose.msra.mxu0 0.0
  %758 = vmatprep.subr.mxu0 0.0
  %759 = vmatpush1.xpose.msra.mxu0 0.0
  %760 = vmatprep.subr.mxu0 0.0
  %761 = vmatpush1.xpose.msra.mxu0 0.0
  %762 = vmatprep.subr.mxu0 0.0
  %763 = vmatpush1.xpose.msra.mxu0 0.0
  %764 = vmatprep.subr.mxu0 0.0
  %765 = vmatpush1.xpose.msra.mxu0 0.0
  %766 = vmatprep.subr.mxu0 0.0
  %767 = vmatpush1.xpose.msra.mxu0 0.0
  %768 = vmatprep.subr.mxu0 0.0
  %769 = vmatpush1.xpose.msra.mxu0 0.0
  %770 = vmatprep.subr.mxu0 0.0
  %771 = vmatpush1.xpose.msra.mxu0 0.0
  %772 = vmatprep.subr.mxu0 0.0
  %773 = vmatpush1.xpose.msra.mxu0 0.0
  %774 = vmatprep.subr.mxu0 0.0
  %775 = vmatpush1.xpose.msra.mxu0 0.0
  %776 = vmatprep.subr.mxu0 0.0
  %777 = vmatpush1.xpose.msra.mxu0 0.0
  %778 = vmatprep.subr.mxu0 0.0
  %779 = vmatpush1.xpose.msra.mxu0 0.0
  %780 = vmatprep.subr.mxu0 0.0
  %781 = vmatpush1.xpose.msra.mxu0 0.0
  %782 = vmatprep.subr.mxu0 0.0
  %783 = vmatpush1.xpose.msra.mxu0 0.0
  %784 = vmatprep.subr.mxu0 0.0
  %785 = vmatpush1.xpose.msra.mxu0 0.0
  %786 = vmatprep.subr.mxu0 0.0
  %787 = vmatpush1.xpose.msra.mxu0 0.0
  %788 = vmatprep.subr.mxu0 0.0
  %789 = vmatpush1.xpose.msra.mxu0 0.0
  %790 = vmatprep.subr.mxu0 0.0
  %791 = vmatpush1.xpose.msra.mxu0 0.0
  %792 = vmatprep.mubr.f32.mxu0 0.0
  %793 = vmatmul.mubr.f32.gmra.mrb[0].mxu0 %v722
  %v794 = vpop.f32.mrb[0].mxu0
  %v795 = vadd.f32 0.0, %v794
  %v796 = vpop.f32.mrb[0].mxu0
  %797 = vdwg.mxu0
  %v798 = vsel %vm299, %v795, -inf
  %799 = vmax.xlane.f32.xlu0 %v798
  %v800 = vpop.xlane.xlu0 %799
  %v801 = vsub.f32 %v795, %v800
  %v802 = vmul.f32 %v801, 1.442695
  %v803 = vpow.pop %v802
  %v804 = vsel %vm299, %v803, 0.0
  %805 = vadd.xlane.f32.xlu0 %v804
  %v806 = vpop.xlane.xlu0 %805
  %807 = vrot.lane.b32.xlu0 %v189, 48
  %v808 = vpop.permute.xlu0 %807
  %809 = vrot.lane.b32.xlu0 %v194, 48
  %v810 = vpop.permute.xlu0 %809
  %v814 = vsel %vm299, %v803, 0
  %816 = vmatprep.subr.mxu0 0.0
  %817 = vmatpush1.msra.mxu0 %v808
  %818 = vmatprep.subr.mxu0 0.0
  %819 = vmatpush1.msra.mxu0 %v810
  %820 = vmatprep.subr.mxu0 0.0
  %821 = vmatpush1.msra.mxu0 0.0
  %822 = vmatprep.subr.mxu0 0.0
  %823 = vmatpush1.msra.mxu0 0.0
  %824 = vmatprep.subr.mxu0 0.0
  %825 = vmatpush1.msra.mxu0 0.0
  %826 = vmatprep.subr.mxu0 0.0
  %827 = vmatpush1.msra.mxu0 0.0
  %828 = vmatprep.subr.mxu0 0.0
  %829 = vmatpush1.msra.mxu0 0.0
  %830 = vmatprep.subr.mxu0 0.0
  %831 = vmatpush1.msra.mxu0 0.0
  %832 = vmatprep.subr.mxu0 0.0
  %833 = vmatpush1.msra.mxu0 0.0
  %834 = vmatprep.subr.mxu0 0.0
  %835 = vmatpush1.msra.mxu0 0.0
  %836 = vmatprep.subr.mxu0 0.0
  %837 = vmatpush1.msra.mxu0 0.0
  %838 = vmatprep.subr.mxu0 0.0
  %839 = vmatpush1.msra.mxu0 0.0
  %840 = vmatprep.subr.mxu0 0.0
  %841 = vmatpush1.msra.mxu0 0.0
  %842 = vmatprep.subr.mxu0 0.0
  %843 = vmatpush1.msra.mxu0 0.0
  %844 = vmatprep.subr.mxu0 0.0
  %845 = vmatpush1.msra.mxu0 0.0
  %846 = vmatprep.subr.mxu0 0.0
  %847 = vmatpush1.msra.mxu0 0.0
  %848 = vmatprep.subr.mxu0 0.0
  %849 = vmatpush1.msra.mxu0 0.0
  %850 = vmatprep.subr.mxu0 0.0
  %851 = vmatpush1.msra.mxu0 0.0
  %852 = vmatprep.subr.mxu0 0.0
  %853 = vmatpush1.msra.mxu0 0.0
  %854 = vmatprep.subr.mxu0 0.0
  %855 = vmatpush1.msra.mxu0 0.0
  %856 = vmatprep.subr.mxu0 0.0
  %857 = vmatpush1.msra.mxu0 0.0
  %858 = vmatprep.subr.mxu0 0.0
  %859 = vmatpush1.msra.mxu0 0.0
  %860 = vmatprep.subr.mxu0 0.0
  %861 = vmatpush1.msra.mxu0 0.0
  %862 = vmatprep.subr.mxu0 0.0
  %863 = vmatpush1.msra.mxu0 0.0
  %864 = vmatprep.subr.mxu0 0.0
  %865 = vmatpush1.msra.mxu0 0.0
  %866 = vmatprep.subr.mxu0 0.0
  %867 = vmatpush1.msra.mxu0 0.0
  %868 = vmatprep.subr.mxu0 0.0
  %869 = vmatpush1.msra.mxu0 0.0
  %870 = vmatprep.subr.mxu0 0.0
  %871 = vmatpush1.msra.mxu0 0.0
  %872 = vmatprep.subr.mxu0 0.0
  %873 = vmatpush1.msra.mxu0 0.0
  %874 = vmatprep.subr.mxu0 0.0
  %875 = vmatpush1.msra.mxu0 0.0
  %876 = vmatprep.subr.mxu0 0.0
  %877 = vmatpush1.msra.mxu0 0.0
  %878 = vmatprep.subr.mxu0 0.0
  %879 = vmatpush1.msra.mxu0 0.0
  %880 = vmatprep.mubr.f32.mxu0 0.0
  %881 = vmatmul.mubr.f32.gmra.mrb[0].mxu0 %v814
  %v882 = vpop.f32.mrb[0].mxu0
  %v883 = vadd.f32 0.0, %v882
  %v884 = vpop.f32.mrb[0].mxu0
  %885 = vdwg.mxu0
  %v886 = vrcp.pop %v806
  %v887 = vmul.f32 %v806, %v886
  %v888 = vsub.f32 2.0, %v887
  %v889 = vmul.f32 %v886, %v888
  %v890 = vmul.f32 %v883, %v889
  %v892 = vsel %vm221, %v890, 0
  %894 = vmatprep.subr.mxu0 0.0
  %895 = vmatpush1.msra.mxu0 %v211
  %896 = vmatprep.subr.mxu0 0.0
  %897 = vmatpush1.msra.mxu0 0.0
  %898 = vmatprep.subr.mxu0 0.0
  %899 = vmatpush1.msra.mxu0 0.0
  %900 = vmatprep.subr.mxu0 0.0
  %901 = vmatpush1.msra.mxu0 0.0
  %902 = vmatprep.subr.mxu0 0.0
  %903 = vmatpush1.msra.mxu0 0.0
  %904 = vmatprep.subr.mxu0 0.0
  %905 = vmatpush1.msra.mxu0 0.0
  %906 = vmatprep.subr.mxu0 0.0
  %907 = vmatpush1.msra.mxu0 0.0
  %908 = vmatprep.subr.mxu0 0.0
  %909 = vmatpush1.msra.mxu0 0.0
  %910 = vmatprep.subr.mxu0 0.0
  %911 = vmatpush1.msra.mxu0 0.0
  %912 = vmatprep.subr.mxu0 0.0
  %913 = vmatpush1.msra.mxu0 0.0
  %914 = vmatprep.subr.mxu0 0.0
  %915 = vmatpush1.msra.mxu0 0.0
  %916 = vmatprep.subr.mxu0 0.0
  %917 = vmatpush1.msra.mxu0 0.0
  %918 = vmatprep.subr.mxu0 0.0
  %919 = vmatpush1.msra.mxu0 0.0
  %920 = vmatprep.subr.mxu0 0.0
  %921 = vmatpush1.msra.mxu0 0.0
  %922 = vmatprep.subr.mxu0 0.0
  %923 = vmatpush1.msra.mxu0 0.0
  %924 = vmatprep.subr.mxu0 0.0
  %925 = vmatpush1.msra.mxu0 0.0
  %926 = vmatprep.subr.mxu0 0.0
  %927 = vmatpush1.msra.mxu0 0.0
  %928 = vmatprep.subr.mxu0 0.0
  %929 = vmatpush1.msra.mxu0 0.0
  %930 = vmatprep.subr.mxu0 0.0
  %931 = vmatpush1.msra.mxu0 0.0
  %932 = vmatprep.subr.mxu0 0.0
  %933 = vmatpush1.msra.mxu0 0.0
  %934 = vmatprep.subr.mxu0 0.0
  %935 = vmatpush1.msra.mxu0 0.0
  %936 = vmatprep.subr.mxu0 0.0
  %937 = vmatpush1.msra.mxu0 0.0
  %938 = vmatprep.subr.mxu0 0.0
  %939 = vmatpush1.msra.mxu0 0.0
  %940 = vmatprep.subr.mxu0 0.0
  %941 = vmatpush1.msra.mxu0 0.0
  %942 = vmatprep.subr.mxu0 0.0
  %943 = vmatpush1.msra.mxu0 0.0
  %944 = vmatprep.subr.mxu0 0.0
  %945 = vmatpush1.msra.mxu0 0.0
  %946 = vmatprep.subr.mxu0 0.0
  %947 = vmatpush1.msra.mxu0 0.0
  %948 = vmatprep.subr.mxu0 0.0
  %949 = vmatpush1.msra.mxu0 0.0
  %950 = vmatprep.subr.mxu0 0.0
  %951 = vmatpush1.msra.mxu0 0.0
  %952 = vmatprep.subr.mxu0 0.0
  %953 = vmatpush1.msra.mxu0 0.0
  %954 = vmatprep.subr.mxu0 0.0
  %955 = vmatpush1.msra.mxu0 0.0
  %956 = vmatprep.subr.mxu0 0.0
  %957 = vmatpush1.msra.mxu0 0.0
  %958 = vmatprep.mubr.f32.mxu0 0.0
  %959 = vmatmul.mubr.f32.gmra.mrb[0].mxu0 %v892
  %v960 = vpop.f32.mrb[0].mxu0
  %v961 = vadd.f32 0.0, %v960
  %v962 = vpop.f32.mrb[0].mxu0
  %963 = vdwg.mxu0
  %v964 = vadd.f32 %v713, %v961
  %965 = vrot.lane.b32.xlu0 %v207, 104
  %v966 = vpop.permute.xlu0 %965
  %967 = vrot.lane.b32.xlu0 %v169, 72
  %v968 = vpop.permute.xlu0 %967
  %969 = vrot.lane.b32.xlu0 %v174, 72
  %v970 = vpop.permute.xlu0 %969
  %v971 = vsel %vm221, %v966, 0
  %v973 = vsel %vm221, %v968, 0
  %v975 = vsel %vm221, %v970, 0
  %977 = vmatprep.subr.mxu0 0.0
  %978 = vmatpush1.xpose.msra.mxu0 %v973
  %979 = vmatprep.subr.mxu0 0.0
  %980 = vmatpush1.xpose.msra.mxu0 %v975
  %981 = vmatprep.subr.mxu0 0.0
  %982 = vmatpush1.xpose.msra.mxu0 0.0
  %983 = vmatprep.subr.mxu0 0.0
  %984 = vmatpush1.xpose.msra.mxu0 0.0
  %985 = vmatprep.subr.mxu0 0.0
  %986 = vmatpush1.xpose.msra.mxu0 0.0
  %987 = vmatprep.subr.mxu0 0.0
  %988 = vmatpush1.xpose.msra.mxu0 0.0
  %989 = vmatprep.subr.mxu0 0.0
  %990 = vmatpush1.xpose.msra.mxu0 0.0
  %991 = vmatprep.subr.mxu0 0.0
  %992 = vmatpush1.xpose.msra.mxu0 0.0
  %993 = vmatprep.subr.mxu0 0.0
  %994 = vmatpush1.xpose.msra.mxu0 0.0
  %995 = vmatprep.subr.mxu0 0.0
  %996 = vmatpush1.xpose.msra.mxu0 0.0
  %997 = vmatprep.subr.mxu0 0.0
  %998 = vmatpush1.xpose.msra.mxu0 0.0
  %999 = vmatprep.subr.mxu0 0.0
  %1000 = vmatpush1.xpose.msra.mxu0 0.0
  %1001 = vmatprep.subr.mxu0 0.0
  %1002 = vmatpush1.xpose.msra.mxu0 0.0
  %1003 = vmatprep.subr.mxu0 0.0
  %1004 = vmatpush1.xpose.msra.mxu0 0.0
  %1005 = vmatprep.subr.mxu0 0.0
  %1006 = vmatpush1.xpose.msra.mxu0 0.0
  %1007 = vmatprep.subr.mxu0 0.0
  %1008 = vmatpush1.xpose.msra.mxu0 0.0
  %1009 = vmatprep.subr.mxu0 0.0
  %1010 = vmatpush1.xpose.msra.mxu0 0.0
  %1011 = vmatprep.subr.mxu0 0.0
  %1012 = vmatpush1.xpose.msra.mxu0 0.0
  %1013 = vmatprep.subr.mxu0 0.0
  %1014 = vmatpush1.xpose.msra.mxu0 0.0
  %1015 = vmatprep.subr.mxu0 0.0
  %1016 = vmatpush1.xpose.msra.mxu0 0.0
  %1017 = vmatprep.subr.mxu0 0.0
  %1018 = vmatpush1.xpose.msra.mxu0 0.0
  %1019 = vmatprep.subr.mxu0 0.0
  %1020 = vmatpush1.xpose.msra.mxu0 0.0
  %1021 = vmatprep.subr.mxu0 0.0
  %1022 = vmatpush1.xpose.msra.mxu0 0.0
  %1023 = vmatprep.subr.mxu0 0.0
  %1024 = vmatpush1.xpose.msra.mxu0 0.0
  %1025 = vmatprep.subr.mxu0 0.0
  %1026 = vmatpush1.xpose.msra.mxu0 0.0
  %1027 = vmatprep.subr.mxu0 0.0
  %1028 = vmatpush1.xpose.msra.mxu0 0.0
  %1029 = vmatprep.subr.mxu0 0.0
  %1030 = vmatpush1.xpose.msra.mxu0 0.0
  %1031 = vmatprep.subr.mxu0 0.0
  %1032 = vmatpush1.xpose.msra.mxu0 0.0
  %1033 = vmatprep.subr.mxu0 0.0
  %1034 = vmatpush1.xpose.msra.mxu0 0.0
  %1035 = vmatprep.subr.mxu0 0.0
  %1036 = vmatpush1.xpose.msra.mxu0 0.0
  %1037 = vmatprep.subr.mxu0 0.0
  %1038 = vmatpush1.xpose.msra.mxu0 0.0
  %1039 = vmatprep.subr.mxu0 0.0
  %1040 = vmatpush1.xpose.msra.mxu0 0.0
  %1041 = vmatprep.mubr.f32.mxu0 0.0
  %1042 = vmatmul.mubr.f32.gmra.mrb[0].mxu0 %v971
  %v1043 = vpop.f32.mrb[0].mxu0
  %v1044 = vadd.f32 0.0, %v1043
  %v1045 = vpop.f32.mrb[0].mxu0
  %1046 = vdwg.mxu0
  %v1047 = vsel %vm299, %v1044, -inf
  %1048 = vmax.xlane.f32.xlu0 %v1047
  %v1049 = vpop.xlane.xlu0 %1048
  %v1050 = vsub.f32 %v1044, %v1049
  %v1051 = vmul.f32 %v1050, 1.442695
  %v1052 = vpow.pop %v1051
  %v1053 = vsel %vm299, %v1052, 0.0
  %1054 = vadd.xlane.f32.xlu0 %v1053
  %v1055 = vpop.xlane.xlu0 %1054
  %1056 = vrot.lane.b32.xlu0 %v189, 40
  %v1057 = vpop.permute.xlu0 %1056
  %1058 = vrot.lane.b32.xlu0 %v194, 40
  %v1059 = vpop.permute.xlu0 %1058
  %v1063 = vsel %vm299, %v1052, 0
  %1065 = vmatprep.subr.mxu0 0.0
  %1066 = vmatpush1.msra.mxu0 %v1057
  %1067 = vmatprep.subr.mxu0 0.0
  %1068 = vmatpush1.msra.mxu0 %v1059
  %1069 = vmatprep.subr.mxu0 0.0
  %1070 = vmatpush1.msra.mxu0 0.0
  %1071 = vmatprep.subr.mxu0 0.0
  %1072 = vmatpush1.msra.mxu0 0.0
  %1073 = vmatprep.subr.mxu0 0.0
  %1074 = vmatpush1.msra.mxu0 0.0
  %1075 = vmatprep.subr.mxu0 0.0
  %1076 = vmatpush1.msra.mxu0 0.0
  %1077 = vmatprep.subr.mxu0 0.0
  %1078 = vmatpush1.msra.mxu0 0.0
  %1079 = vmatprep.subr.mxu0 0.0
  %1080 = vmatpush1.msra.mxu0 0.0
  %1081 = vmatprep.subr.mxu0 0.0
  %1082 = vmatpush1.msra.mxu0 0.0
  %1083 = vmatprep.subr.mxu0 0.0
  %1084 = vmatpush1.msra.mxu0 0.0
  %1085 = vmatprep.subr.mxu0 0.0
  %1086 = vmatpush1.msra.mxu0 0.0
  %1087 = vmatprep.subr.mxu0 0.0
  %1088 = vmatpush1.msra.mxu0 0.0
  %1089 = vmatprep.subr.mxu0 0.0
  %1090 = vmatpush1.msra.mxu0 0.0
  %1091 = vmatprep.subr.mxu0 0.0
  %1092 = vmatpush1.msra.mxu0 0.0
  %1093 = vmatprep.subr.mxu0 0.0
  %1094 = vmatpush1.msra.mxu0 0.0
  %1095 = vmatprep.subr.mxu0 0.0
  %1096 = vmatpush1.msra.mxu0 0.0
  %1097 = vmatprep.subr.mxu0 0.0
  %1098 = vmatpush1.msra.mxu0 0.0
  %1099 = vmatprep.subr.mxu0 0.0
  %1100 = vmatpush1.msra.mxu0 0.0
  %1101 = vmatprep.subr.mxu0 0.0
  %1102 = vmatpush1.msra.mxu0 0.0
  %1103 = vmatprep.subr.mxu0 0.0
  %1104 = vmatpush1.msra.mxu0 0.0
  %1105 = vmatprep.subr.mxu0 0.0
  %1106 = vmatpush1.msra.mxu0 0.0
  %1107 = vmatprep.subr.mxu0 0.0
  %1108 = vmatpush1.msra.mxu0 0.0
  %1109 = vmatprep.subr.mxu0 0.0
  %1110 = vmatpush1.msra.mxu0 0.0
  %1111 = vmatprep.subr.mxu0 0.0
  %1112 = vmatpush1.msra.mxu0 0.0
  %1113 = vmatprep.subr.mxu0 0.0
  %1114 = vmatpush1.msra.mxu0 0.0
  %1115 = vmatprep.subr.mxu0 0.0
  %1116 = vmatpush1.msra.mxu0 0.0
  %1117 = vmatprep.subr.mxu0 0.0
  %1118 = vmatpush1.msra.mxu0 0.0
  %1119 = vmatprep.subr.mxu0 0.0
  %1120 = vmatpush1.msra.mxu0 0.0
  %1121 = vmatprep.subr.mxu0 0.0
  %1122 = vmatpush1.msra.mxu0 0.0
  %1123 = vmatprep.subr.mxu0 0.0
  %1124 = vmatpush1.msra.mxu0 0.0
  %1125 = vmatprep.subr.mxu0 0.0
  %1126 = vmatpush1.msra.mxu0 0.0
  %1127 = vmatprep.subr.mxu0 0.0
  %1128 = vmatpush1.msra.mxu0 0.0
  %1129 = vmatprep.mubr.f32.mxu0 0.0
  %1130 = vmatmul.mubr.f32.gmra.mrb[0].mxu0 %v1063
  %v1131 = vpop.f32.mrb[0].mxu0
  %v1132 = vadd.f32 0.0, %v1131
  %v1133 = vpop.f32.mrb[0].mxu0
  %1134 = vdwg.mxu0
  %v1135 = vrcp.pop %v1055
  %v1136 = vmul.f32 %v1055, %v1135
  %v1137 = vsub.f32 2.0, %v1136
  %v1138 = vmul.f32 %v1135, %v1137
  %v1139 = vmul.f32 %v1132, %v1138
  %v1141 = vsel %vm221, %v1139, 0
  %1143 = vmatprep.subr.mxu0 0.0
  %1144 = vmatpush1.msra.mxu0 %v212
  %1145 = vmatprep.subr.mxu0 0.0
  %1146 = vmatpush1.msra.mxu0 0.0
  %1147 = vmatprep.subr.mxu0 0.0
  %1148 = vmatpush1.msra.mxu0 0.0
  %1149 = vmatprep.subr.mxu0 0.0
  %1150 = vmatpush1.msra.mxu0 0.0
  %1151 = vmatprep.subr.mxu0 0.0
  %1152 = vmatpush1.msra.mxu0 0.0
  %1153 = vmatprep.subr.mxu0 0.0
  %1154 = vmatpush1.msra.mxu0 0.0
  %1155 = vmatprep.subr.mxu0 0.0
  %1156 = vmatpush1.msra.mxu0 0.0
  %1157 = vmatprep.subr.mxu0 0.0
  %1158 = vmatpush1.msra.mxu0 0.0
  %1159 = vmatprep.subr.mxu0 0.0
  %1160 = vmatpush1.msra.mxu0 0.0
  %1161 = vmatprep.subr.mxu0 0.0
  %1162 = vmatpush1.msra.mxu0 0.0
  %1163 = vmatprep.subr.mxu0 0.0
  %1164 = vmatpush1.msra.mxu0 0.0
  %1165 = vmatprep.subr.mxu0 0.0
  %1166 = vmatpush1.msra.mxu0 0.0
  %1167 = vmatprep.subr.mxu0 0.0
  %1168 = vmatpush1.msra.mxu0 0.0
  %1169 = vmatprep.subr.mxu0 0.0
  %1170 = vmatpush1.msra.mxu0 0.0
  %1171 = vmatprep.subr.mxu0 0.0
  %1172 = vmatpush1.msra.mxu0 0.0
  %1173 = vmatprep.subr.mxu0 0.0
  %1174 = vmatpush1.msra.mxu0 0.0
  %1175 = vmatprep.subr.mxu0 0.0
  %1176 = vmatpush1.msra.mxu0 0.0
  %1177 = vmatprep.subr.mxu0 0.0
  %1178 = vmatpush1.msra.mxu0 0.0
  %1179 = vmatprep.subr.mxu0 0.0
  %1180 = vmatpush1.msra.mxu0 0.0
  %1181 = vmatprep.subr.mxu0 0.0
  %1182 = vmatpush1.msra.mxu0 0.0
  %1183 = vmatprep.subr.mxu0 0.0
  %1184 = vmatpush1.msra.mxu0 0.0
  %1185 = vmatprep.subr.mxu0 0.0
  %1186 = vmatpush1.msra.mxu0 0.0
  %1187 = vmatprep.subr.mxu0 0.0
  %1188 = vmatpush1.msra.mxu0 0.0
  %1189 = vmatprep.subr.mxu0 0.0
  %1190 = vmatpush1.msra.mxu0 0.0
  %1191 = vmatprep.subr.mxu0 0.0
  %1192 = vmatpush1.msra.mxu0 0.0
  %1193 = vmatprep.subr.mxu0 0.0
  %1194 = vmatpush1.msra.mxu0 0.0
  %1195 = vmatprep.subr.mxu0 0.0
  %1196 = vmatpush1.msra.mxu0 0.0
  %1197 = vmatprep.subr.mxu0 0.0
  %1198 = vmatpush1.msra.mxu0 0.0
  %1199 = vmatprep.subr.mxu0 0.0
  %1200 = vmatpush1.msra.mxu0 0.0
  %1201 = vmatprep.subr.mxu0 0.0
  %1202 = vmatpush1.msra.mxu0 0.0
  %1203 = vmatprep.subr.mxu0 0.0
  %1204 = vmatpush1.msra.mxu0 0.0
  %1205 = vmatprep.subr.mxu0 0.0
  %1206 = vmatpush1.msra.mxu0 0.0
  %1207 = vmatprep.mubr.f32.mxu0 0.0
  %1208 = vmatmul.mubr.f32.gmra.mrb[0].mxu0 %v1141
  %v1209 = vpop.f32.mrb[0].mxu0
  %v1210 = vadd.f32 0.0, %v1209
  %v1211 = vpop.f32.mrb[0].mxu0
  %1212 = vdwg.mxu0
  %v1213 = vadd.f32 %v964, %v1210
  %1216 = vrot.lane.b32.xlu0 %v179, 96
  %v1217 = vpop.permute.xlu0 %1216
  %1218 = vrot.lane.b32.xlu0 %v184, 96
  %v1219 = vpop.permute.xlu0 %1218
  %v1221 = vsel %vm221, %v208, 0
  %v1223 = vsel %vm221, %v1217, 0
  %v1225 = vsel %vm221, %v1219, 0
  %1227 = vmatprep.subr.mxu0 0.0
  %1228 = vmatpush1.xpose.msra.mxu0 %v1223
  %1229 = vmatprep.subr.mxu0 0.0
  %1230 = vmatpush1.xpose.msra.mxu0 %v1225
  %1231 = vmatprep.subr.mxu0 0.0
  %1232 = vmatpush1.xpose.msra.mxu0 0.0
  %1233 = vmatprep.subr.mxu0 0.0
  %1234 = vmatpush1.xpose.msra.mxu0 0.0
  %1235 = vmatprep.subr.mxu0 0.0
  %1236 = vmatpush1.xpose.msra.mxu0 0.0
  %1237 = vmatprep.subr.mxu0 0.0
  %1238 = vmatpush1.xpose.msra.mxu0 0.0
  %1239 = vmatprep.subr.mxu0 0.0
  %1240 = vmatpush1.xpose.msra.mxu0 0.0
  %1241 = vmatprep.subr.mxu0 0.0
  %1242 = vmatpush1.xpose.msra.mxu0 0.0
  %1243 = vmatprep.subr.mxu0 0.0
  %1244 = vmatpush1.xpose.msra.mxu0 0.0
  %1245 = vmatprep.subr.mxu0 0.0
  %1246 = vmatpush1.xpose.msra.mxu0 0.0
  %1247 = vmatprep.subr.mxu0 0.0
  %1248 = vmatpush1.xpose.msra.mxu0 0.0
  %1249 = vmatprep.subr.mxu0 0.0
  %1250 = vmatpush1.xpose.msra.mxu0 0.0
  %1251 = vmatprep.subr.mxu0 0.0
  %1252 = vmatpush1.xpose.msra.mxu0 0.0
  %1253 = vmatprep.subr.mxu0 0.0
  %1254 = vmatpush1.xpose.msra.mxu0 0.0
  %1255 = vmatprep.subr.mxu0 0.0
  %1256 = vmatpush1.xpose.msra.mxu0 0.0
  %1257 = vmatprep.subr.mxu0 0.0
  %1258 = vmatpush1.xpose.msra.mxu0 0.0
  %1259 = vmatprep.subr.mxu0 0.0
  %1260 = vmatpush1.xpose.msra.mxu0 0.0
  %1261 = vmatprep.subr.mxu0 0.0
  %1262 = vmatpush1.xpose.msra.mxu0 0.0
  %1263 = vmatprep.subr.mxu0 0.0
  %1264 = vmatpush1.xpose.msra.mxu0 0.0
  %1265 = vmatprep.subr.mxu0 0.0
  %1266 = vmatpush1.xpose.msra.mxu0 0.0
  %1267 = vmatprep.subr.mxu0 0.0
  %1268 = vmatpush1.xpose.msra.mxu0 0.0
  %1269 = vmatprep.subr.mxu0 0.0
  %1270 = vmatpush1.xpose.msra.mxu0 0.0
  %1271 = vmatprep.subr.mxu0 0.0
  %1272 = vmatpush1.xpose.msra.mxu0 0.0
  %1273 = vmatprep.subr.mxu0 0.0
  %1274 = vmatpush1.xpose.msra.mxu0 0.0
  %1275 = vmatprep.subr.mxu0 0.0
  %1276 = vmatpush1.xpose.msra.mxu0 0.0
  %1277 = vmatprep.subr.mxu0 0.0
  %1278 = vmatpush1.xpose.msra.mxu0 0.0
  %1279 = vmatprep.subr.mxu0 0.0
  %1280 = vmatpush1.xpose.msra.mxu0 0.0
  %1281 = vmatprep.subr.mxu0 0.0
  %1282 = vmatpush1.xpose.msra.mxu0 0.0
  %1283 = vmatprep.subr.mxu0 0.0
  %1284 = vmatpush1.xpose.msra.mxu0 0.0
  %1285 = vmatprep.subr.mxu0 0.0
  %1286 = vmatpush1.xpose.msra.mxu0 0.0
  %1287 = vmatprep.subr.mxu0 0.0
  %1288 = vmatpush1.xpose.msra.mxu0 0.0
  %1289 = vmatprep.subr.mxu0 0.0
  %1290 = vmatpush1.xpose.msra.mxu0 0.0
  %1291 = vmatprep.mubr.f32.mxu0 0.0
  %1292 = vmatmul.mubr.f32.gmra.mrb[0].mxu0 %v1221
  %v1293 = vpop.f32.mrb[0].mxu0
  %v1294 = vadd.f32 0.0, %v1293
  %v1295 = vpop.f32.mrb[0].mxu0
  %1296 = vdwg.mxu0
  %v1297 = vsel %vm299, %v1294, -inf
  %1298 = vmax.xlane.f32.xlu0 %v1297
  %v1299 = vpop.xlane.xlu0 %1298
  %v1300 = vsub.f32 %v1294, %v1299
  %v1301 = vmul.f32 %v1300, 1.442695
  %v1302 = vpow.pop %v1301
  %v1303 = vsel %vm299, %v1302, 0.0
  %1304 = vadd.xlane.f32.xlu0 %v1303
  %v1305 = vpop.xlane.xlu0 %1304
  %1308 = vrot.lane.b32.xlu0 %v199, 64
  %v1309 = vpop.permute.xlu0 %1308
  %1310 = vrot.lane.b32.xlu0 %v204, 64
  %v1311 = vpop.permute.xlu0 %1310
  %v1315 = vsel %vm299, %v1302, 0
  %1317 = vmatprep.subr.mxu0 0.0
  %1318 = vmatpush1.msra.mxu0 %v1309
  %1319 = vmatprep.subr.mxu0 0.0
  %1320 = vmatpush1.msra.mxu0 %v1311
  %1321 = vmatprep.subr.mxu0 0.0
  %1322 = vmatpush1.msra.mxu0 0.0
  %1323 = vmatprep.subr.mxu0 0.0
  %1324 = vmatpush1.msra.mxu0 0.0
  %1325 = vmatprep.subr.mxu0 0.0
  %1326 = vmatpush1.msra.mxu0 0.0
  %1327 = vmatprep.subr.mxu0 0.0
  %1328 = vmatpush1.msra.mxu0 0.0
  %1329 = vmatprep.subr.mxu0 0.0
  %1330 = vmatpush1.msra.mxu0 0.0
  %1331 = vmatprep.subr.mxu0 0.0
  %1332 = vmatpush1.msra.mxu0 0.0
  %1333 = vmatprep.subr.mxu0 0.0
  %1334 = vmatpush1.msra.mxu0 0.0
  %1335 = vmatprep.subr.mxu0 0.0
  %1336 = vmatpush1.msra.mxu0 0.0
  %1337 = vmatprep.subr.mxu0 0.0
  %1338 = vmatpush1.msra.mxu0 0.0
  %1339 = vmatprep.subr.mxu0 0.0
  %1340 = vmatpush1.msra.mxu0 0.0
  %1341 = vmatprep.subr.mxu0 0.0
  %1342 = vmatpush1.msra.mxu0 0.0
  %1343 = vmatprep.subr.mxu0 0.0
  %1344 = vmatpush1.msra.mxu0 0.0
  %1345 = vmatprep.subr.mxu0 0.0
  %1346 = vmatpush1.msra.mxu0 0.0
  %1347 = vmatprep.subr.mxu0 0.0
  %1348 = vmatpush1.msra.mxu0 0.0
  %1349 = vmatprep.subr.mxu0 0.0
  %1350 = vmatpush1.msra.mxu0 0.0
  %1351 = vmatprep.subr.mxu0 0.0
  %1352 = vmatpush1.msra.mxu0 0.0
  %1353 = vmatprep.subr.mxu0 0.0
  %1354 = vmatpush1.msra.mxu0 0.0
  %1355 = vmatprep.subr.mxu0 0.0
  %1356 = vmatpush1.msra.mxu0 0.0
  %1357 = vmatprep.subr.mxu0 0.0
  %1358 = vmatpush1.msra.mxu0 0.0
  %1359 = vmatprep.subr.mxu0 0.0
  %1360 = vmatpush1.msra.mxu0 0.0
  %1361 = vmatprep.subr.mxu0 0.0
  %1362 = vmatpush1.msra.mxu0 0.0
  %1363 = vmatprep.subr.mxu0 0.0
  %1364 = vmatpush1.msra.mxu0 0.0
  %1365 = vmatprep.subr.mxu0 0.0
  %1366 = vmatpush1.msra.mxu0 0.0
  %1367 = vmatprep.subr.mxu0 0.0
  %1368 = vmatpush1.msra.mxu0 0.0
  %1369 = vmatprep.subr.mxu0 0.0
  %1370 = vmatpush1.msra.mxu0 0.0
  %1371 = vmatprep.subr.mxu0 0.0
  %1372 = vmatpush1.msra.mxu0 0.0
  %1373 = vmatprep.subr.mxu0 0.0
  %1374 = vmatpush1.msra.mxu0 0.0
  %1375 = vmatprep.subr.mxu0 0.0
  %1376 = vmatpush1.msra.mxu0 0.0
  %1377 = vmatprep.subr.mxu0 0.0
  %1378 = vmatpush1.msra.mxu0 0.0
  %1379 = vmatprep.subr.mxu0 0.0
  %1380 = vmatpush1.msra.mxu0 0.0
  %1381 = vmatprep.mubr.f32.mxu0 0.0
  %1382 = vmatmul.mubr.f32.gmra.mrb[0].mxu0 %v1315
  %v1383 = vpop.f32.mrb[0].mxu0
  %v1384 = vadd.f32 0.0, %v1383
  %v1385 = vpop.f32.mrb[0].mxu0
  %1386 = vdwg.mxu0
  %v1387 = vrcp.pop %v1305
  %v1388 = vmul.f32 %v1305, %v1387
  %v1389 = vsub.f32 2.0, %v1388
  %v1390 = vmul.f32 %v1387, %v1389
  %v1391 = vmul.f32 %v1384, %v1390
  %1392 = vrot.lane.b32.xlu0 %v208, 120
  %v1393 = vpop.permute.xlu0 %1392
  %1394 = vrot.lane.b32.xlu0 %v179, 88
  %v1395 = vpop.permute.xlu0 %1394
  %1396 = vrot.lane.b32.xlu0 %v184, 88
  %v1397 = vpop.permute.xlu0 %1396
  %v1398 = vsel %vm221, %v1393, 0
  %v1400 = vsel %vm221, %v1395, 0
  %v1402 = vsel %vm221, %v1397, 0
  %1404 = vmatprep.subr.mxu0 0.0
  %1405 = vmatpush1.xpose.msra.mxu0 %v1400
  %1406 = vmatprep.subr.mxu0 0.0
  %1407 = vmatpush1.xpose.msra.mxu0 %v1402
  %1408 = vmatprep.subr.mxu0 0.0
  %1409 = vmatpush1.xpose.msra.mxu0 0.0
  %1410 = vmatprep.subr.mxu0 0.0
  %1411 = vmatpush1.xpose.msra.mxu0 0.0
  %1412 = vmatprep.subr.mxu0 0.0
  %1413 = vmatpush1.xpose.msra.mxu0 0.0
  %1414 = vmatprep.subr.mxu0 0.0
  %1415 = vmatpush1.xpose.msra.mxu0 0.0
  %1416 = vmatprep.subr.mxu0 0.0
  %1417 = vmatpush1.xpose.msra.mxu0 0.0
  %1418 = vmatprep.subr.mxu0 0.0
  %1419 = vmatpush1.xpose.msra.mxu0 0.0
  %1420 = vmatprep.subr.mxu0 0.0
  %1421 = vmatpush1.xpose.msra.mxu0 0.0
  %1422 = vmatprep.subr.mxu0 0.0
  %1423 = vmatpush1.xpose.msra.mxu0 0.0
  %1424 = vmatprep.subr.mxu0 0.0
  %1425 = vmatpush1.xpose.msra.mxu0 0.0
  %1426 = vmatprep.subr.mxu0 0.0
  %1427 = vmatpush1.xpose.msra.mxu0 0.0
  %1428 = vmatprep.subr.mxu0 0.0
  %1429 = vmatpush1.xpose.msra.mxu0 0.0
  %1430 = vmatprep.subr.mxu0 0.0
  %1431 = vmatpush1.xpose.msra.mxu0 0.0
  %1432 = vmatprep.subr.mxu0 0.0
  %1433 = vmatpush1.xpose.msra.mxu0 0.0
  %1434 = vmatprep.subr.mxu0 0.0
  %1435 = vmatpush1.xpose.msra.mxu0 0.0
  %1436 = vmatprep.subr.mxu0 0.0
  %1437 = vmatpush1.xpose.msra.mxu0 0.0
  %1438 = vmatprep.subr.mxu0 0.0
  %1439 = vmatpush1.xpose.msra.mxu0 0.0
  %1440 = vmatprep.subr.mxu0 0.0
  %1441 = vmatpush1.xpose.msra.mxu0 0.0
  %1442 = vmatprep.subr.mxu0 0.0
  %1443 = vmatpush1.xpose.msra.mxu0 0.0
  %1444 = vmatprep.subr.mxu0 0.0
  %1445 = vmatpush1.xpose.msra.mxu0 0.0
  %1446 = vmatprep.subr.mxu0 0.0
  %1447 = vmatpush1.xpose.msra.mxu0 0.0
  %1448 = vmatprep.subr.mxu0 0.0
  %1449 = vmatpush1.xpose.msra.mxu0 0.0
  %1450 = vmatprep.subr.mxu0 0.0
  %1451 = vmatpush1.xpose.msra.mxu0 0.0
  %1452 = vmatprep.subr.mxu0 0.0
  %1453 = vmatpush1.xpose.msra.mxu0 0.0
  %1454 = vmatprep.subr.mxu0 0.0
  %1455 = vmatpush1.xpose.msra.mxu0 0.0
  %1456 = vmatprep.subr.mxu0 0.0
  %1457 = vmatpush1.xpose.msra.mxu0 0.0
  %1458 = vmatprep.subr.mxu0 0.0
  %1459 = vmatpush1.xpose.msra.mxu0 0.0
  %1460 = vmatprep.subr.mxu0 0.0
  %1461 = vmatpush1.xpose.msra.mxu0 0.0
  %1462 = vmatprep.subr.mxu0 0.0
  %1463 = vmatpush1.xpose.msra.mxu0 0.0
  %1464 = vmatprep.subr.mxu0 0.0
  %1465 = vmatpush1.xpose.msra.mxu0 0.0
  %1466 = vmatprep.subr.mxu0 0.0
  %1467 = vmatpush1.xpose.msra.mxu0 0.0
  %1468 = vmatprep.mubr.f32.mxu0 0.0
  %1469 = vmatmul.mubr.f32.gmra.mrb[0].mxu0 %v1398
  %v1470 = vpop.f32.mrb[0].mxu0
  %v1471 = vadd.f32 0.0, %v1470
  %v1472 = vpop.f32.mrb[0].mxu0
  %1473 = vdwg.mxu0
  %v1474 = vsel %vm299, %v1471, -inf
  %1475 = vmax.xlane.f32.xlu0 %v1474
  %v1476 = vpop.xlane.xlu0 %1475
  %v1477 = vsub.f32 %v1471, %v1476
  %v1478 = vmul.f32 %v1477, 1.442695
  %v1479 = vpow.pop %v1478
  %v1480 = vsel %vm299, %v1479, 0.0
  %1481 = vadd.xlane.f32.xlu0 %v1480
  %v1482 = vpop.xlane.xlu0 %1481
  %1483 = vrot.lane.b32.xlu0 %v199, 56
  %v1484 = vpop.permute.xlu0 %1483
  %1485 = vrot.lane.b32.xlu0 %v204, 56
  %v1486 = vpop.permute.xlu0 %1485
  %v1490 = vsel %vm299, %v1479, 0
  %1492 = vmatprep.subr.mxu0 0.0
  %1493 = vmatpush1.msra.mxu0 %v1484
  %1494 = vmatprep.subr.mxu0 0.0
  %1495 = vmatpush1.msra.mxu0 %v1486
  %1496 = vmatprep.subr.mxu0 0.0
  %1497 = vmatpush1.msra.mxu0 0.0
  %1498 = vmatprep.subr.mxu0 0.0
  %1499 = vmatpush1.msra.mxu0 0.0
  %1500 = vmatprep.subr.mxu0 0.0
  %1501 = vmatpush1.msra.mxu0 0.0
  %1502 = vmatprep.subr.mxu0 0.0
  %1503 = vmatpush1.msra.mxu0 0.0
  %1504 = vmatprep.subr.mxu0 0.0
  %1505 = vmatpush1.msra.mxu0 0.0
  %1506 = vmatprep.subr.mxu0 0.0
  %1507 = vmatpush1.msra.mxu0 0.0
  %1508 = vmatprep.subr.mxu0 0.0
  %1509 = vmatpush1.msra.mxu0 0.0
  %1510 = vmatprep.subr.mxu0 0.0
  %1511 = vmatpush1.msra.mxu0 0.0
  %1512 = vmatprep.subr.mxu0 0.0
  %1513 = vmatpush1.msra.mxu0 0.0
  %1514 = vmatprep.subr.mxu0 0.0
  %1515 = vmatpush1.msra.mxu0 0.0
  %1516 = vmatprep.subr.mxu0 0.0
  %1517 = vmatpush1.msra.mxu0 0.0
  %1518 = vmatprep.subr.mxu0 0.0
  %1519 = vmatpush1.msra.mxu0 0.0
  %1520 = vmatprep.subr.mxu0 0.0
  %1521 = vmatpush1.msra.mxu0 0.0
  %1522 = vmatprep.subr.mxu0 0.0
  %1523 = vmatpush1.msra.mxu0 0.0
  %1524 = vmatprep.subr.mxu0 0.0
  %1525 = vmatpush1.msra.mxu0 0.0
  %1526 = vmatprep.subr.mxu0 0.0
  %1527 = vmatpush1.msra.mxu0 0.0
  %1528 = vmatprep.subr.mxu0 0.0
  %1529 = vmatpush1.msra.mxu0 0.0
  %1530 = vmatprep.subr.mxu0 0.0
  %1531 = vmatpush1.msra.mxu0 0.0
  %1532 = vmatprep.subr.mxu0 0.0
  %1533 = vmatpush1.msra.mxu0 0.0
  %1534 = vmatprep.subr.mxu0 0.0
  %1535 = vmatpush1.msra.mxu0 0.0
  %1536 = vmatprep.subr.mxu0 0.0
  %1537 = vmatpush1.msra.mxu0 0.0
  %1538 = vmatprep.subr.mxu0 0.0
  %1539 = vmatpush1.msra.mxu0 0.0
  %1540 = vmatprep.subr.mxu0 0.0
  %1541 = vmatpush1.msra.mxu0 0.0
  %1542 = vmatprep.subr.mxu0 0.0
  %1543 = vmatpush1.msra.mxu0 0.0
  %1544 = vmatprep.subr.mxu0 0.0
  %1545 = vmatpush1.msra.mxu0 0.0
  %1546 = vmatprep.subr.mxu0 0.0
  %1547 = vmatpush1.msra.mxu0 0.0
  %1548 = vmatprep.subr.mxu0 0.0
  %1549 = vmatpush1.msra.mxu0 0.0
  %1550 = vmatprep.subr.mxu0 0.0
  %1551 = vmatpush1.msra.mxu0 0.0
  %1552 = vmatprep.subr.mxu0 0.0
  %1553 = vmatpush1.msra.mxu0 0.0
  %1554 = vmatprep.subr.mxu0 0.0
  %1555 = vmatpush1.msra.mxu0 0.0
  %1556 = vmatprep.mubr.f32.mxu0 0.0
  %1557 = vmatmul.mubr.f32.gmra.mrb[0].mxu0 %v1490
  %v1558 = vpop.f32.mrb[0].mxu0
  %v1559 = vadd.f32 0.0, %v1558
  %v1560 = vpop.f32.mrb[0].mxu0
  %1561 = vdwg.mxu0
  %v1562 = vrcp.pop %v1482
  %v1563 = vmul.f32 %v1482, %v1562
  %v1564 = vsub.f32 2.0, %v1563
  %v1565 = vmul.f32 %v1562, %v1564
  %v1566 = vmul.f32 %v1559, %v1565
  %v1568 = vsel %vm221, %v1566, 0
  %1570 = vmatprep.subr.mxu0 0.0
  %1571 = vmatpush1.msra.mxu0 %v210
  %1572 = vmatprep.subr.mxu0 0.0
  %1573 = vmatpush1.msra.mxu0 0.0
  %1574 = vmatprep.subr.mxu0 0.0
  %1575 = vmatpush1.msra.mxu0 0.0
  %1576 = vmatprep.subr.mxu0 0.0
  %1577 = vmatpush1.msra.mxu0 0.0
  %1578 = vmatprep.subr.mxu0 0.0
  %1579 = vmatpush1.msra.mxu0 0.0
  %1580 = vmatprep.subr.mxu0 0.0
  %1581 = vmatpush1.msra.mxu0 0.0
  %1582 = vmatprep.subr.mxu0 0.0
  %1583 = vmatpush1.msra.mxu0 0.0
  %1584 = vmatprep.subr.mxu0 0.0
  %1585 = vmatpush1.msra.mxu0 0.0
  %1586 = vmatprep.subr.mxu0 0.0
  %1587 = vmatpush1.msra.mxu0 0.0
  %1588 = vmatprep.subr.mxu0 0.0
  %1589 = vmatpush1.msra.mxu0 0.0
  %1590 = vmatprep.subr.mxu0 0.0
  %1591 = vmatpush1.msra.mxu0 0.0
  %1592 = vmatprep.subr.mxu0 0.0
  %1593 = vmatpush1.msra.mxu0 0.0
  %1594 = vmatprep.subr.mxu0 0.0
  %1595 = vmatpush1.msra.mxu0 0.0
  %1596 = vmatprep.subr.mxu0 0.0
  %1597 = vmatpush1.msra.mxu0 0.0
  %1598 = vmatprep.subr.mxu0 0.0
  %1599 = vmatpush1.msra.mxu0 0.0
  %1600 = vmatprep.subr.mxu0 0.0
  %1601 = vmatpush1.msra.mxu0 0.0
  %1602 = vmatprep.subr.mxu0 0.0
  %1603 = vmatpush1.msra.mxu0 0.0
  %1604 = vmatprep.subr.mxu0 0.0
  %1605 = vmatpush1.msra.mxu0 0.0
  %1606 = vmatprep.subr.mxu0 0.0
  %1607 = vmatpush1.msra.mxu0 0.0
  %1608 = vmatprep.subr.mxu0 0.0
  %1609 = vmatpush1.msra.mxu0 0.0
  %1610 = vmatprep.subr.mxu0 0.0
  %1611 = vmatpush1.msra.mxu0 0.0
  %1612 = vmatprep.subr.mxu0 0.0
  %1613 = vmatpush1.msra.mxu0 0.0
  %1614 = vmatprep.subr.mxu0 0.0
  %1615 = vmatpush1.msra.mxu0 0.0
  %1616 = vmatprep.subr.mxu0 0.0
  %1617 = vmatpush1.msra.mxu0 0.0
  %1618 = vmatprep.subr.mxu0 0.0
  %1619 = vmatpush1.msra.mxu0 0.0
  %1620 = vmatprep.subr.mxu0 0.0
  %1621 = vmatpush1.msra.mxu0 0.0
  %1622 = vmatprep.subr.mxu0 0.0
  %1623 = vmatpush1.msra.mxu0 0.0
  %1624 = vmatprep.subr.mxu0 0.0
  %1625 = vmatpush1.msra.mxu0 0.0
  %1626 = vmatprep.subr.mxu0 0.0
  %1627 = vmatpush1.msra.mxu0 0.0
  %1628 = vmatprep.subr.mxu0 0.0
  %1629 = vmatpush1.msra.mxu0 0.0
  %1630 = vmatprep.subr.mxu0 0.0
  %1631 = vmatpush1.msra.mxu0 0.0
  %1632 = vmatprep.subr.mxu0 0.0
  %1633 = vmatpush1.msra.mxu0 0.0
  %1634 = vmatprep.mubr.f32.mxu0 0.0
  %1635 = vmatmul.mubr.f32.gmra.mrb[0].mxu0 %v1568
  %v1636 = vpop.f32.mrb[0].mxu0
  %v1637 = vadd.f32 0.0, %v1636
  %v1638 = vpop.f32.mrb[0].mxu0
  %1639 = vdwg.mxu0
  %v1641 = vsel %vm221, %v1391, 0
  %1643 = vmatprep.subr.mxu0 0.0
  %1644 = vmatpush1.msra.mxu0 %v209
  %1645 = vmatprep.subr.mxu0 0.0
  %1646 = vmatpush1.msra.mxu0 0.0
  %1647 = vmatprep.subr.mxu0 0.0
  %1648 = vmatpush1.msra.mxu0 0.0
  %1649 = vmatprep.subr.mxu0 0.0
  %1650 = vmatpush1.msra.mxu0 0.0
  %1651 = vmatprep.subr.mxu0 0.0
  %1652 = vmatpush1.msra.mxu0 0.0
  %1653 = vmatprep.subr.mxu0 0.0
  %1654 = vmatpush1.msra.mxu0 0.0
  %1655 = vmatprep.subr.mxu0 0.0
  %1656 = vmatpush1.msra.mxu0 0.0
  %1657 = vmatprep.subr.mxu0 0.0
  %1658 = vmatpush1.msra.mxu0 0.0
  %1659 = vmatprep.subr.mxu0 0.0
  %1660 = vmatpush1.msra.mxu0 0.0
  %1661 = vmatprep.subr.mxu0 0.0
  %1662 = vmatpush1.msra.mxu0 0.0
  %1663 = vmatprep.subr.mxu0 0.0
  %1664 = vmatpush1.msra.mxu0 0.0
  %1665 = vmatprep.subr.mxu0 0.0
  %1666 = vmatpush1.msra.mxu0 0.0
  %1667 = vmatprep.subr.mxu0 0.0
  %1668 = vmatpush1.msra.mxu0 0.0
  %1669 = vmatprep.subr.mxu0 0.0
  %1670 = vmatpush1.msra.mxu0 0.0
  %1671 = vmatprep.subr.mxu0 0.0
  %1672 = vmatpush1.msra.mxu0 0.0
  %1673 = vmatprep.subr.mxu0 0.0
  %1674 = vmatpush1.msra.mxu0 0.0
  %1675 = vmatprep.subr.mxu0 0.0
  %1676 = vmatpush1.msra.mxu0 0.0
  %1677 = vmatprep.subr.mxu0 0.0
  %1678 = vmatpush1.msra.mxu0 0.0
  %1679 = vmatprep.subr.mxu0 0.0
  %1680 = vmatpush1.msra.mxu0 0.0
  %1681 = vmatprep.subr.mxu0 0.0
  %1682 = vmatpush1.msra.mxu0 0.0
  %1683 = vmatprep.subr.mxu0 0.0
  %1684 = vmatpush1.msra.mxu0 0.0
  %1685 = vmatprep.subr.mxu0 0.0
  %1686 = vmatpush1.msra.mxu0 0.0
  %1687 = vmatprep.subr.mxu0 0.0
  %1688 = vmatpush1.msra.mxu0 0.0
  %1689 = vmatprep.subr.mxu0 0.0
  %1690 = vmatpush1.msra.mxu0 0.0
  %1691 = vmatprep.subr.mxu0 0.0
  %1692 = vmatpush1.msra.mxu0 0.0
  %1693 = vmatprep.subr.mxu0 0.0
  %1694 = vmatpush1.msra.mxu0 0.0
  %1695 = vmatprep.subr.mxu0 0.0
  %1696 = vmatpush1.msra.mxu0 0.0
  %1697 = vmatprep.subr.mxu0 0.0
  %1698 = vmatpush1.msra.mxu0 0.0
  %1699 = vmatprep.subr.mxu0 0.0
  %1700 = vmatpush1.msra.mxu0 0.0
  %1701 = vmatprep.subr.mxu0 0.0
  %1702 = vmatpush1.msra.mxu0 0.0
  %1703 = vmatprep.subr.mxu0 0.0
  %1704 = vmatpush1.msra.mxu0 0.0
  %1705 = vmatprep.subr.mxu0 0.0
  %1706 = vmatpush1.msra.mxu0 0.0
  %1707 = vmatprep.mubr.f32.mxu0 0.0
  %1708 = vmatmul.mubr.f32.gmra.mrb[0].mxu0 %v1641
  %v1709 = vpop.f32.mrb[0].mxu0
  %v1710 = vadd.f32 %v1637, %v1709
  %v1711 = vpop.f32.mrb[0].mxu0
  %1712 = vdwg.mxu0
  %1713 = vrot.lane.b32.xlu0 %v208, 112
  %v1714 = vpop.permute.xlu0 %1713
  %1715 = vrot.lane.b32.xlu0 %v179, 80
  %v1716 = vpop.permute.xlu0 %1715
  %1717 = vrot.lane.b32.xlu0 %v184, 80
  %v1718 = vpop.permute.xlu0 %1717
  %v1719 = vsel %vm221, %v1714, 0
  %v1721 = vsel %vm221, %v1716, 0
  %v1723 = vsel %vm221, %v1718, 0
  %1725 = vmatprep.subr.mxu0 0.0
  %1726 = vmatpush1.xpose.msra.mxu0 %v1721
  %1727 = vmatprep.subr.mxu0 0.0
  %1728 = vmatpush1.xpose.msra.mxu0 %v1723
  %1729 = vmatprep.subr.mxu0 0.0
  %1730 = vmatpush1.xpose.msra.mxu0 0.0
  %1731 = vmatprep.subr.mxu0 0.0
  %1732 = vmatpush1.xpose.msra.mxu0 0.0
  %1733 = vmatprep.subr.mxu0 0.0
  %1734 = vmatpush1.xpose.msra.mxu0 0.0
  %1735 = vmatprep.subr.mxu0 0.0
  %1736 = vmatpush1.xpose.msra.mxu0 0.0
  %1737 = vmatprep.subr.mxu0 0.0
  %1738 = vmatpush1.xpose.msra.mxu0 0.0
  %1739 = vmatprep.subr.mxu0 0.0
  %1740 = vmatpush1.xpose.msra.mxu0 0.0
  %1741 = vmatprep.subr.mxu0 0.0
  %1742 = vmatpush1.xpose.msra.mxu0 0.0
  %1743 = vmatprep.subr.mxu0 0.0
  %1744 = vmatpush1.xpose.msra.mxu0 0.0
  %1745 = vmatprep.subr.mxu0 0.0
  %1746 = vmatpush1.xpose.msra.mxu0 0.0
  %1747 = vmatprep.subr.mxu0 0.0
  %1748 = vmatpush1.xpose.msra.mxu0 0.0
  %1749 = vmatprep.subr.mxu0 0.0
  %1750 = vmatpush1.xpose.msra.mxu0 0.0
  %1751 = vmatprep.subr.mxu0 0.0
  %1752 = vmatpush1.xpose.msra.mxu0 0.0
  %1753 = vmatprep.subr.mxu0 0.0
  %1754 = vmatpush1.xpose.msra.mxu0 0.0
  %1755 = vmatprep.subr.mxu0 0.0
  %1756 = vmatpush1.xpose.msra.mxu0 0.0
  %1757 = vmatprep.subr.mxu0 0.0
  %1758 = vmatpush1.xpose.msra.mxu0 0.0
  %1759 = vmatprep.subr.mxu0 0.0
  %1760 = vmatpush1.xpose.msra.mxu0 0.0
  %1761 = vmatprep.subr.mxu0 0.0
  %1762 = vmatpush1.xpose.msra.mxu0 0.0
  %1763 = vmatprep.subr.mxu0 0.0
  %1764 = vmatpush1.xpose.msra.mxu0 0.0
  %1765 = vmatprep.subr.mxu0 0.0
  %1766 = vmatpush1.xpose.msra.mxu0 0.0
  %1767 = vmatprep.subr.mxu0 0.0
  %1768 = vmatpush1.xpose.msra.mxu0 0.0
  %1769 = vmatprep.subr.mxu0 0.0
  %1770 = vmatpush1.xpose.msra.mxu0 0.0
  %1771 = vmatprep.subr.mxu0 0.0
  %1772 = vmatpush1.xpose.msra.mxu0 0.0
  %1773 = vmatprep.subr.mxu0 0.0
  %1774 = vmatpush1.xpose.msra.mxu0 0.0
  %1775 = vmatprep.subr.mxu0 0.0
  %1776 = vmatpush1.xpose.msra.mxu0 0.0
  %1777 = vmatprep.subr.mxu0 0.0
  %1778 = vmatpush1.xpose.msra.mxu0 0.0
  %1779 = vmatprep.subr.mxu0 0.0
  %1780 = vmatpush1.xpose.msra.mxu0 0.0
  %1781 = vmatprep.subr.mxu0 0.0
  %1782 = vmatpush1.xpose.msra.mxu0 0.0
  %1783 = vmatprep.subr.mxu0 0.0
  %1784 = vmatpush1.xpose.msra.mxu0 0.0
  %1785 = vmatprep.subr.mxu0 0.0
  %1786 = vmatpush1.xpose.msra.mxu0 0.0
  %1787 = vmatprep.subr.mxu0 0.0
  %1788 = vmatpush1.xpose.msra.mxu0 0.0
  %1789 = vmatprep.mubr.f32.mxu0 0.0
  %1790 = vmatmul.mubr.f32.gmra.mrb[0].mxu0 %v1719
  %v1791 = vpop.f32.mrb[0].mxu0
  %v1792 = vadd.f32 0.0, %v1791
  %v1793 = vpop.f32.mrb[0].mxu0
  %1794 = vdwg.mxu0
  %v1795 = vsel %vm299, %v1792, -inf
  %1796 = vmax.xlane.f32.xlu0 %v1795
  %v1797 = vpop.xlane.xlu0 %1796
  %v1798 = vsub.f32 %v1792, %v1797
  %v1799 = vmul.f32 %v1798, 1.442695
  %v1800 = vpow.pop %v1799
  %v1801 = vsel %vm299, %v1800, 0.0
  %1802 = vadd.xlane.f32.xlu0 %v1801
  %v1803 = vpop.xlane.xlu0 %1802
  %1804 = vrot.lane.b32.xlu0 %v199, 48
  %v1805 = vpop.permute.xlu0 %1804
  %1806 = vrot.lane.b32.xlu0 %v204, 48
  %v1807 = vpop.permute.xlu0 %1806
  %v1811 = vsel %vm299, %v1800, 0
  %1813 = vmatprep.subr.mxu0 0.0
  %1814 = vmatpush1.msra.mxu0 %v1805
  %1815 = vmatprep.subr.mxu0 0.0
  %1816 = vmatpush1.msra.mxu0 %v1807
  %1817 = vmatprep.subr.mxu0 0.0
  %1818 = vmatpush1.msra.mxu0 0.0
  %1819 = vmatprep.subr.mxu0 0.0
  %1820 = vmatpush1.msra.mxu0 0.0
  %1821 = vmatprep.subr.mxu0 0.0
  %1822 = vmatpush1.msra.mxu0 0.0
  %1823 = vmatprep.subr.mxu0 0.0
  %1824 = vmatpush1.msra.mxu0 0.0
  %1825 = vmatprep.subr.mxu0 0.0
  %1826 = vmatpush1.msra.mxu0 0.0
  %1827 = vmatprep.subr.mxu0 0.0
  %1828 = vmatpush1.msra.mxu0 0.0
  %1829 = vmatprep.subr.mxu0 0.0
  %1830 = vmatpush1.msra.mxu0 0.0
  %1831 = vmatprep.subr.mxu0 0.0
  %1832 = vmatpush1.msra.mxu0 0.0
  %1833 = vmatprep.subr.mxu0 0.0
  %1834 = vmatpush1.msra.mxu0 0.0
  %1835 = vmatprep.subr.mxu0 0.0
  %1836 = vmatpush1.msra.mxu0 0.0
  %1837 = vmatprep.subr.mxu0 0.0
  %1838 = vmatpush1.msra.mxu0 0.0
  %1839 = vmatprep.subr.mxu0 0.0
  %1840 = vmatpush1.msra.mxu0 0.0
  %1841 = vmatprep.subr.mxu0 0.0
  %1842 = vmatpush1.msra.mxu0 0.0
  %1843 = vmatprep.subr.mxu0 0.0
  %1844 = vmatpush1.msra.mxu0 0.0
  %1845 = vmatprep.subr.mxu0 0.0
  %1846 = vmatpush1.msra.mxu0 0.0
  %1847 = vmatprep.subr.mxu0 0.0
  %1848 = vmatpush1.msra.mxu0 0.0
  %1849 = vmatprep.subr.mxu0 0.0
  %1850 = vmatpush1.msra.mxu0 0.0
  %1851 = vmatprep.subr.mxu0 0.0
  %1852 = vmatpush1.msra.mxu0 0.0
  %1853 = vmatprep.subr.mxu0 0.0
  %1854 = vmatpush1.msra.mxu0 0.0
  %1855 = vmatprep.subr.mxu0 0.0
  %1856 = vmatpush1.msra.mxu0 0.0
  %1857 = vmatprep.subr.mxu0 0.0
  %1858 = vmatpush1.msra.mxu0 0.0
  %1859 = vmatprep.subr.mxu0 0.0
  %1860 = vmatpush1.msra.mxu0 0.0
  %1861 = vmatprep.subr.mxu0 0.0
  %1862 = vmatpush1.msra.mxu0 0.0
  %1863 = vmatprep.subr.mxu0 0.0
  %1864 = vmatpush1.msra.mxu0 0.0
  %1865 = vmatprep.subr.mxu0 0.0
  %1866 = vmatpush1.msra.mxu0 0.0
  %1867 = vmatprep.subr.mxu0 0.0
  %1868 = vmatpush1.msra.mxu0 0.0
  %1869 = vmatprep.subr.mxu0 0.0
  %1870 = vmatpush1.msra.mxu0 0.0
  %1871 = vmatprep.subr.mxu0 0.0
  %1872 = vmatpush1.msra.mxu0 0.0
  %1873 = vmatprep.subr.mxu0 0.0
  %1874 = vmatpush1.msra.mxu0 0.0
  %1875 = vmatprep.subr.mxu0 0.0
  %1876 = vmatpush1.msra.mxu0 0.0
  %1877 = vmatprep.mubr.f32.mxu0 0.0
  %1878 = vmatmul.mubr.f32.gmra.mrb[0].mxu0 %v1811
  %v1879 = vpop.f32.mrb[0].mxu0
  %v1880 = vadd.f32 0.0, %v1879
  %v1881 = vpop.f32.mrb[0].mxu0
  %1882 = vdwg.mxu0
  %v1883 = vrcp.pop %v1803
  %v1884 = vmul.f32 %v1803, %v1883
  %v1885 = vsub.f32 2.0, %v1884
  %v1886 = vmul.f32 %v1883, %v1885
  %v1887 = vmul.f32 %v1880, %v1886
  %v1889 = vsel %vm221, %v1887, 0
  %1891 = vmatprep.subr.mxu0 0.0
  %1892 = vmatpush1.msra.mxu0 %v211
  %1893 = vmatprep.subr.mxu0 0.0
  %1894 = vmatpush1.msra.mxu0 0.0
  %1895 = vmatprep.subr.mxu0 0.0
  %1896 = vmatpush1.msra.mxu0 0.0
  %1897 = vmatprep.subr.mxu0 0.0
  %1898 = vmatpush1.msra.mxu0 0.0
  %1899 = vmatprep.subr.mxu0 0.0
  %1900 = vmatpush1.msra.mxu0 0.0
  %1901 = vmatprep.subr.mxu0 0.0
  %1902 = vmatpush1.msra.mxu0 0.0
  %1903 = vmatprep.subr.mxu0 0.0
  %1904 = vmatpush1.msra.mxu0 0.0
  %1905 = vmatprep.subr.mxu0 0.0
  %1906 = vmatpush1.msra.mxu0 0.0
  %1907 = vmatprep.subr.mxu0 0.0
  %1908 = vmatpush1.msra.mxu0 0.0
  %1909 = vmatprep.subr.mxu0 0.0
  %1910 = vmatpush1.msra.mxu0 0.0
  %1911 = vmatprep.subr.mxu0 0.0
  %1912 = vmatpush1.msra.mxu0 0.0
  %1913 = vmatprep.subr.mxu0 0.0
  %1914 = vmatpush1.msra.mxu0 0.0
  %1915 = vmatprep.subr.mxu0 0.0
  %1916 = vmatpush1.msra.mxu0 0.0
  %1917 = vmatprep.subr.mxu0 0.0
  %1918 = vmatpush1.msra.mxu0 0.0
  %1919 = vmatprep.subr.mxu0 0.0
  %1920 = vmatpush1.msra.mxu0 0.0
  %1921 = vmatprep.subr.mxu0 0.0
  %1922 = vmatpush1.msra.mxu0 0.0
  %1923 = vmatprep.subr.mxu0 0.0
  %1924 = vmatpush1.msra.mxu0 0.0
  %1925 = vmatprep.subr.mxu0 0.0
  %1926 = vmatpush1.msra.mxu0 0.0
  %1927 = vmatprep.subr.mxu0 0.0
  %1928 = vmatpush1.msra.mxu0 0.0
  %1929 = vmatprep.subr.mxu0 0.0
  %1930 = vmatpush1.msra.mxu0 0.0
  %1931 = vmatprep.subr.mxu0 0.0
  %1932 = vmatpush1.msra.mxu0 0.0
  %1933 = vmatprep.subr.mxu0 0.0
  %1934 = vmatpush1.msra.mxu0 0.0
  %1935 = vmatprep.subr.mxu0 0.0
  %1936 = vmatpush1.msra.mxu0 0.0
  %1937 = vmatprep.subr.mxu0 0.0
  %1938 = vmatpush1.msra.mxu0 0.0
  %1939 = vmatprep.subr.mxu0 0.0
  %1940 = vmatpush1.msra.mxu0 0.0
  %1941 = vmatprep.subr.mxu0 0.0
  %1942 = vmatpush1.msra.mxu0 0.0
  %1943 = vmatprep.subr.mxu0 0.0
  %1944 = vmatpush1.msra.mxu0 0.0
  %1945 = vmatprep.subr.mxu0 0.0
  %1946 = vmatpush1.msra.mxu0 0.0
  %1947 = vmatprep.subr.mxu0 0.0
  %1948 = vmatpush1.msra.mxu0 0.0
  %1949 = vmatprep.subr.mxu0 0.0
  %1950 = vmatpush1.msra.mxu0 0.0
  %1951 = vmatprep.subr.mxu0 0.0
  %1952 = vmatpush1.msra.mxu0 0.0
  %1953 = vmatprep.subr.mxu0 0.0
  %1954 = vmatpush1.msra.mxu0 0.0
  %1955 = vmatprep.mubr.f32.mxu0 0.0
  %1956 = vmatmul.mubr.f32.gmra.mrb[0].mxu0 %v1889
  %v1957 = vpop.f32.mrb[0].mxu0
  %v1958 = vadd.f32 0.0, %v1957
  %v1959 = vpop.f32.mrb[0].mxu0
  %1960 = vdwg.mxu0
  %v1961 = vadd.f32 %v1710, %v1958
  %1962 = vrot.lane.b32.xlu0 %v208, 104
  %v1963 = vpop.permute.xlu0 %1962
  %1964 = vrot.lane.b32.xlu0 %v179, 72
  %v1965 = vpop.permute.xlu0 %1964
  %1966 = vrot.lane.b32.xlu0 %v184, 72
  %v1967 = vpop.permute.xlu0 %1966
  %v1968 = vsel %vm221, %v1963, 0
  %v1970 = vsel %vm221, %v1965, 0
  %v1972 = vsel %vm221, %v1967, 0
  %1974 = vmatprep.subr.mxu0 0.0
  %1975 = vmatpush1.xpose.msra.mxu0 %v1970
  %1976 = vmatprep.subr.mxu0 0.0
  %1977 = vmatpush1.xpose.msra.mxu0 %v1972
  %1978 = vmatprep.subr.mxu0 0.0
  %1979 = vmatpush1.xpose.msra.mxu0 0.0
  %1980 = vmatprep.subr.mxu0 0.0
  %1981 = vmatpush1.xpose.msra.mxu0 0.0
  %1982 = vmatprep.subr.mxu0 0.0
  %1983 = vmatpush1.xpose.msra.mxu0 0.0
  %1984 = vmatprep.subr.mxu0 0.0
  %1985 = vmatpush1.xpose.msra.mxu0 0.0
  %1986 = vmatprep.subr.mxu0 0.0
  %1987 = vmatpush1.xpose.msra.mxu0 0.0
  %1988 = vmatprep.subr.mxu0 0.0
  %1989 = vmatpush1.xpose.msra.mxu0 0.0
  %1990 = vmatprep.subr.mxu0 0.0
  %1991 = vmatpush1.xpose.msra.mxu0 0.0
  %1992 = vmatprep.subr.mxu0 0.0
  %1993 = vmatpush1.xpose.msra.mxu0 0.0
  %1994 = vmatprep.subr.mxu0 0.0
  %1995 = vmatpush1.xpose.msra.mxu0 0.0
  %1996 = vmatprep.subr.mxu0 0.0
  %1997 = vmatpush1.xpose.msra.mxu0 0.0
  %1998 = vmatprep.subr.mxu0 0.0
  %1999 = vmatpush1.xpose.msra.mxu0 0.0
  %2000 = vmatprep.subr.mxu0 0.0
  %2001 = vmatpush1.xpose.msra.mxu0 0.0
  %2002 = vmatprep.subr.mxu0 0.0
  %2003 = vmatpush1.xpose.msra.mxu0 0.0
  %2004 = vmatprep.subr.mxu0 0.0
  %2005 = vmatpush1.xpose.msra.mxu0 0.0
  %2006 = vmatprep.subr.mxu0 0.0
  %2007 = vmatpush1.xpose.msra.mxu0 0.0
  %2008 = vmatprep.subr.mxu0 0.0
  %2009 = vmatpush1.xpose.msra.mxu0 0.0
  %2010 = vmatprep.subr.mxu0 0.0
  %2011 = vmatpush1.xpose.msra.mxu0 0.0
  %2012 = vmatprep.subr.mxu0 0.0
  %2013 = vmatpush1.xpose.msra.mxu0 0.0
  %2014 = vmatprep.subr.mxu0 0.0
  %2015 = vmatpush1.xpose.msra.mxu0 0.0
  %2016 = vmatprep.subr.mxu0 0.0
  %2017 = vmatpush1.xpose.msra.mxu0 0.0
  %2018 = vmatprep.subr.mxu0 0.0
  %2019 = vmatpush1.xpose.msra.mxu0 0.0
  %2020 = vmatprep.subr.mxu0 0.0
  %2021 = vmatpush1.xpose.msra.mxu0 0.0
  %2022 = vmatprep.subr.mxu0 0.0
  %2023 = vmatpush1.xpose.msra.mxu0 0.0
  %2024 = vmatprep.subr.mxu0 0.0
  %2025 = vmatpush1.xpose.msra.mxu0 0.0
  %2026 = vmatprep.subr.mxu0 0.0
  %2027 = vmatpush1.xpose.msra.mxu0 0.0
  %2028 = vmatprep.subr.mxu0 0.0
  %2029 = vmatpush1.xpose.msra.mxu0 0.0
  %2030 = vmatprep.subr.mxu0 0.0
  %2031 = vmatpush1.xpose.msra.mxu0 0.0
  %2032 = vmatprep.subr.mxu0 0.0
  %2033 = vmatpush1.xpose.msra.mxu0 0.0
  %2034 = vmatprep.subr.mxu0 0.0
  %2035 = vmatpush1.xpose.msra.mxu0 0.0
  %2036 = vmatprep.subr.mxu0 0.0
  %2037 = vmatpush1.xpose.msra.mxu0 0.0
  %2038 = vmatprep.mubr.f32.mxu0 0.0
  %2039 = vmatmul.mubr.f32.gmra.mrb[0].mxu0 %v1968
  %v2040 = vpop.f32.mrb[0].mxu0
  %v2041 = vadd.f32 0.0, %v2040
  %v2042 = vpop.f32.mrb[0].mxu0
  %2043 = vdwg.mxu0
  %v2044 = vsel %vm299, %v2041, -inf
  %2045 = vmax.xlane.f32.xlu0 %v2044
  %v2046 = vpop.xlane.xlu0 %2045
  %v2047 = vsub.f32 %v2041, %v2046
  %v2048 = vmul.f32 %v2047, 1.442695
  %v2049 = vpow.pop %v2048
  %v2050 = vsel %vm299, %v2049, 0.0
  %2051 = vadd.xlane.f32.xlu0 %v2050
  %v2052 = vpop.xlane.xlu0 %2051
  %2053 = vrot.lane.b32.xlu0 %v199, 40
  %v2054 = vpop.permute.xlu0 %2053
  %2055 = vrot.lane.b32.xlu0 %v204, 40
  %v2056 = vpop.permute.xlu0 %2055
  %v2060 = vsel %vm299, %v2049, 0
  %2062 = vmatprep.subr.mxu0 0.0
  %2063 = vmatpush1.msra.mxu0 %v2054
  %2064 = vmatprep.subr.mxu0 0.0
  %2065 = vmatpush1.msra.mxu0 %v2056
  %2066 = vmatprep.subr.mxu0 0.0
  %2067 = vmatpush1.msra.mxu0 0.0
  %2068 = vmatprep.subr.mxu0 0.0
  %2069 = vmatpush1.msra.mxu0 0.0
  %2070 = vmatprep.subr.mxu0 0.0
  %2071 = vmatpush1.msra.mxu0 0.0
  %2072 = vmatprep.subr.mxu0 0.0
  %2073 = vmatpush1.msra.mxu0 0.0
  %2074 = vmatprep.subr.mxu0 0.0
  %2075 = vmatpush1.msra.mxu0 0.0
  %2076 = vmatprep.subr.mxu0 0.0
  %2077 = vmatpush1.msra.mxu0 0.0
  %2078 = vmatprep.subr.mxu0 0.0
  %2079 = vmatpush1.msra.mxu0 0.0
  %2080 = vmatprep.subr.mxu0 0.0
  %2081 = vmatpush1.msra.mxu0 0.0
  %2082 = vmatprep.subr.mxu0 0.0
  %2083 = vmatpush1.msra.mxu0 0.0
  %2084 = vmatprep.subr.mxu0 0.0
  %2085 = vmatpush1.msra.mxu0 0.0
  %2086 = vmatprep.subr.mxu0 0.0
  %2087 = vmatpush1.msra.mxu0 0.0
  %2088 = vmatprep.subr.mxu0 0.0
  %2089 = vmatpush1.msra.mxu0 0.0
  %2090 = vmatprep.subr.mxu0 0.0
  %2091 = vmatpush1.msra.mxu0 0.0
  %2092 = vmatprep.subr.mxu0 0.0
  %2093 = vmatpush1.msra.mxu0 0.0
  %2094 = vmatprep.subr.mxu0 0.0
  %2095 = vmatpush1.msra.mxu0 0.0
  %2096 = vmatprep.subr.mxu0 0.0
  %2097 = vmatpush1.msra.mxu0 0.0
  %2098 = vmatprep.subr.mxu0 0.0
  %2099 = vmatpush1.msra.mxu0 0.0
  %2100 = vmatprep.subr.mxu0 0.0
  %2101 = vmatpush1.msra.mxu0 0.0
  %2102 = vmatprep.subr.mxu0 0.0
  %2103 = vmatpush1.msra.mxu0 0.0
  %2104 = vmatprep.subr.mxu0 0.0
  %2105 = vmatpush1.msra.mxu0 0.0
  %2106 = vmatprep.subr.mxu0 0.0
  %2107 = vmatpush1.msra.mxu0 0.0
  %2108 = vmatprep.subr.mxu0 0.0
  %2109 = vmatpush1.msra.mxu0 0.0
  %2110 = vmatprep.subr.mxu0 0.0
  %2111 = vmatpush1.msra.mxu0 0.0
  %2112 = vmatprep.subr.mxu0 0.0
  %2113 = vmatpush1.msra.mxu0 0.0
  %2114 = vmatprep.subr.mxu0 0.0
  %2115 = vmatpush1.msra.mxu0 0.0
  %2116 = vmatprep.subr.mxu0 0.0
  %2117 = vmatpush1.msra.mxu0 0.0
  %2118 = vmatprep.subr.mxu0 0.0
  %2119 = vmatpush1.msra.mxu0 0.0
  %2120 = vmatprep.subr.mxu0 0.0
  %2121 = vmatpush1.msra.mxu0 0.0
  %2122 = vmatprep.subr.mxu0 0.0
  %2123 = vmatpush1.msra.mxu0 0.0
  %2124 = vmatprep.subr.mxu0 0.0
  %2125 = vmatpush1.msra.mxu0 0.0
  %2126 = vmatprep.mubr.f32.mxu0 0.0
  %2127 = vmatmul.mubr.f32.gmra.mrb[0].mxu0 %v2060
  %v2128 = vpop.f32.mrb[0].mxu0
  %v2129 = vadd.f32 0.0, %v2128
  %v2130 = vpop.f32.mrb[0].mxu0
  %2131 = vdwg.mxu0
  %v2132 = vrcp.pop %v2052
  %v2133 = vmul.f32 %v2052, %v2132
  %v2134 = vsub.f32 2.0, %v2133
  %v2135 = vmul.f32 %v2132, %v2134
  %v2136 = vmul.f32 %v2129, %v2135
  %v2138 = vsel %vm221, %v2136, 0
  %2140 = vmatprep.subr.mxu0 0.0
  %2141 = vmatpush1.msra.mxu0 %v212
  %2142 = vmatprep.subr.mxu0 0.0
  %2143 = vmatpush1.msra.mxu0 0.0
  %2144 = vmatprep.subr.mxu0 0.0
  %2145 = vmatpush1.msra.mxu0 0.0
  %2146 = vmatprep.subr.mxu0 0.0
  %2147 = vmatpush1.msra.mxu0 0.0
  %2148 = vmatprep.subr.mxu0 0.0
  %2149 = vmatpush1.msra.mxu0 0.0
  %2150 = vmatprep.subr.mxu0 0.0
  %2151 = vmatpush1.msra.mxu0 0.0
  %2152 = vmatprep.subr.mxu0 0.0
  %2153 = vmatpush1.msra.mxu0 0.0
  %2154 = vmatprep.subr.mxu0 0.0
  %2155 = vmatpush1.msra.mxu0 0.0
  %2156 = vmatprep.subr.mxu0 0.0
  %2157 = vmatpush1.msra.mxu0 0.0
  %2158 = vmatprep.subr.mxu0 0.0
  %2159 = vmatpush1.msra.mxu0 0.0
  %2160 = vmatprep.subr.mxu0 0.0
  %2161 = vmatpush1.msra.mxu0 0.0
  %2162 = vmatprep.subr.mxu0 0.0
  %2163 = vmatpush1.msra.mxu0 0.0
  %2164 = vmatprep.subr.mxu0 0.0
  %2165 = vmatpush1.msra.mxu0 0.0
  %2166 = vmatprep.subr.mxu0 0.0
  %2167 = vmatpush1.msra.mxu0 0.0
  %2168 = vmatprep.subr.mxu0 0.0
  %2169 = vmatpush1.msra.mxu0 0.0
  %2170 = vmatprep.subr.mxu0 0.0
  %2171 = vmatpush1.msra.mxu0 0.0
  %2172 = vmatprep.subr.mxu0 0.0
  %2173 = vmatpush1.msra.mxu0 0.0
  %2174 = vmatprep.subr.mxu0 0.0
  %2175 = vmatpush1.msra.mxu0 0.0
  %2176 = vmatprep.subr.mxu0 0.0
  %2177 = vmatpush1.msra.mxu0 0.0
  %2178 = vmatprep.subr.mxu0 0.0
  %2179 = vmatpush1.msra.mxu0 0.0
  %2180 = vmatprep.subr.mxu0 0.0
  %2181 = vmatpush1.msra.mxu0 0.0
  %2182 = vmatprep.subr.mxu0 0.0
  %2183 = vmatpush1.msra.mxu0 0.0
  %2184 = vmatprep.subr.mxu0 0.0
  %2185 = vmatpush1.msra.mxu0 0.0
  %2186 = vmatprep.subr.mxu0 0.0
  %2187 = vmatpush1.msra.mxu0 0.0
  %2188 = vmatprep.subr.mxu0 0.0
  %2189 = vmatpush1.msra.mxu0 0.0
  %2190 = vmatprep.subr.mxu0 0.0
  %2191 = vmatpush1.msra.mxu0 0.0
  %2192 = vmatprep.subr.mxu0 0.0
  %2193 = vmatpush1.msra.mxu0 0.0
  %2194 = vmatprep.subr.mxu0 0.0
  %2195 = vmatpush1.msra.mxu0 0.0
  %2196 = vmatprep.subr.mxu0 0.0
  %2197 = vmatpush1.msra.mxu0 0.0
  %2198 = vmatprep.subr.mxu0 0.0
  %2199 = vmatpush1.msra.mxu0 0.0
  %2200 = vmatprep.subr.mxu0 0.0
  %2201 = vmatpush1.msra.mxu0 0.0
  %2202 = vmatprep.subr.mxu0 0.0
  %2203 = vmatpush1.msra.mxu0 0.0
  %2204 = vmatprep.mubr.f32.mxu0 0.0
  %2205 = vmatmul.mubr.f32.gmra.mrb[0].mxu0 %v2138
  %v2206 = vpop.f32.mrb[0].mxu0
  %v2207 = vadd.f32 0.0, %v2206
  %v2208 = vpop.f32.mrb[0].mxu0
  %2209 = vdwg.mxu0
  %v2210 = vadd.f32 %v1961, %v2207
  %v2211 = vadd.f32 %v32, %v1213
  %v2212 = vadd.f32 %v33, %v2210
  %v2213 = vld [vmem:[%s7] sm:$0x1]
  %v2215 = vlaneseq
  %v2216 = vshrl.u32 %v2215, 7
  %v2217 = vsub.s32 0, %v2216
  %v2218 = vrot.slane %v2213, %v2217
  %v2220 = vadd.f32 %v2211, %v2218
  %v2221 = vadd.f32 %v2212, %v2218
  %v2222 = vsel %vm61, %v2220, 0.0
  %2223 = vadd.xlane.f32.xlu0 %v2222
  %v2224 = vpop.xlane.xlu0 %2223
  %v2225 = vsel %vm61, %v2221, 0.0
  %2226 = vadd.xlane.f32.xlu0 %v2225
  %v2227 = vpop.xlane.xlu0 %2226
  %v2228 = vrcp.pop 32.0
  %v2229 = vmul.f32 %v2224, %v2228
  %v2230 = vmul.f32 %v2227, %v2228
  %v2231 = vsub.f32 %v2220, %v2229
  %v2232 = vsub.f32 %v2221, %v2230
  %v2233 = vmul.f32 %v2231, %v2231
  %v2234 = vmul.f32 %v2232, %v2232
  %v2235 = vsel %vm61, %v2233, 0.0
  %2236 = vadd.xlane.f32.xlu0 %v2235
  %v2237 = vpop.xlane.xlu0 %2236
  %v2238 = vsel %vm61, %v2234, 0.0
  %2239 = vadd.xlane.f32.xlu0 %v2238
  %v2240 = vpop.xlane.xlu0 %2239
  %v2241 = vmul.f32 %v2237, %v2228
  %v2242 = vmul.f32 %v2240, %v2228
  %v2243 = vadd.f32 %v2241, 1e-05
  %v2244 = vadd.f32 %v2242, 1e-05
  %v2245 = vrsqrt.pop %v2243
  %v2246 = vrsqrt.pop %v2244
  %v2247 = vmul.f32 %v2231, %v2245
  %v2248 = vmul.f32 %v2232, %v2246
  %v2249 = vlaneseq
  %v2250 = vshrl.u32 %v2249, 7
  %v2251 = vsub.s32 0, %v2250
  %v2252 = vrot.slane %v213, %v2251
  %v2253 = vmul.f32 %v2247, %v2252
  %v2254 = vmul.f32 %v2248, %v2252
  %v2255 = vlaneseq
  %v2256 = vshrl.u32 %v2255, 7
  %v2257 = vsub.s32 0, %v2256
  %v2258 = vrot.slane %v214, %v2257
  %v2259 = vadd.f32 %v2253, %v2258
  %v2260 = vadd.f32 %v2254, %v2258
  %2261 = vst.msk [vmem:[%s9] sm:$0xff] %vm61, %v2259
  %2262 = vst.msk [vmem:[%s9 + $0x8] sm:$0xff] %vm61, %v2260
  // Predicated region
  $region38: #{cross_attention_layer.1} parent=0 // pred_check
    _
  $region39: #{cross_attention_layer.1} parent=0 // pred_check_branch
    %2264 = sbr.rel (0) target = $region41
  $region40: #{cross_attention_layer.1} parent=0 // pred_region
    _
  $region41: #{cross_attention_layer.1} parent=0 // pred_fallthru
    _
  // Predicated region
  $region42: #{cross_attention_layer.1} parent=0 // pred_check
    _
  $region43: #{cross_attention_layer.1} parent=0 // pred_check_branch
    %2266 = sbr.rel (0) target = $region45
  $region44: #{cross_attention_layer.1} parent=0 // pred_region
    _
  $region45: #{cross_attention_layer.1} parent=0 // pred_fallthru
    _

</llo_original>
